<compile_context>
chip_gen: v7x
topology: tpu7x:2x2x1
jax: 0.10.0
libtpu: 0.0.40
codegen_flags: <defaults>
</compile_context>

<pallas_src>
import functools
import math

import jax
import jax.numpy as jnp
import numpy as np
from jax.experimental import pallas as pl
from jax.experimental.pallas import tpu as pltpu

# ---------------- model dims (small, synthetic) ----------------
B = 2          # batch
S = 8          # sequence length
D = 32         # embed_dim (d_model)
H = 4          # num_heads (must be even for BetterTransformer)
HD = D // H    # head size
F = 4 * D      # ffn dim
EPS = 1e-5     # norm1_eps == norm2_eps
USE_GELU = False   # FSMT default activation_function == 'relu'


def _layer_norm(x, w, b, eps):
    mu = jnp.mean(x, axis=-1, keepdims=True)
    var = jnp.mean((x - mu) ** 2, axis=-1, keepdims=True)
    return (x - mu) * jax.lax.rsqrt(var + eps) * w + b


def encoder_layer_kernel(x_ref, w_ref, w2_ref, vec_ref, o_ref, *,
                         seq_len, num_heads, eps, use_gelu):
    """Whole layer in one grid step; all R = B*S rows live in VMEM."""
    x = x_ref[...]                                   # [R, D] f32
    R, d = x.shape
    f = w2_ref.shape[0]
    hd = d // num_heads
    scale = 1.0 / math.sqrt(hd)

    # Packed bias / layernorm vectors: one per row, every slice starts at lane 0.
    vec = vec_ref[...]                               # [16, 128]
    bq, bk, bv = vec[0:1, :d], vec[1:2, :d], vec[2:3, :d]
    bo = vec[3:4, :d]
    n1w, n1b = vec[4:5, :d], vec[5:6, :d]
    b1 = vec[6:7, :f]
    b2 = vec[7:8, :d]
    n2w, n2b = vec[8:9, :d], vec[9:10, :d]

    # ---- input projections: three separate dots, each result lane-0 aligned ----
    q = (jnp.dot(x, w_ref[:, 0:d], preferred_element_type=jnp.float32) + bq) * scale
    k = jnp.dot(x, w_ref[:, d:2 * d], preferred_element_type=jnp.float32) + bk
    v = jnp.dot(x, w_ref[:, 2 * d:3 * d], preferred_element_type=jnp.float32) + bv
    kT = k.T                                         # single 2-D transpose [D, R]

    # ---- block-diagonal mask keeps both batches fused in the row axis ----
    # batch id of a row = floor((row + 0.5) / S)  (float trick avoids int div)
    ri = jax.lax.broadcasted_iota(jnp.int32, (R, R), 0).astype(jnp.float32)
    ci = jax.lax.broadcasted_iota(jnp.int32, (R, R), 1).astype(jnp.float32)
    rb = jnp.floor((ri + 0.5) * (1.0 / seq_len))
    cb = jnp.floor((ci + 0.5) * (1.0 / seq_len))
    mask_bias = jnp.where(rb == cb, 0.0, -1e30).astype(jnp.float32)   # [R, R]

    # ---- multi-head attention: per-head static lane slices, all-2-D matmuls.
    # Head concat + out-projection folded into a per-head accumulate.
    attn = jnp.zeros((R, d), jnp.float32)
    for h in range(num_heads):                       # tiny static unroll
        lo, hi = h * hd, (h + 1) * hd
        s = jnp.dot(q[:, lo:hi], kT[lo:hi, :],
                    preferred_element_type=jnp.float32) + mask_bias   # [R, R]
        s = s - jnp.max(s, axis=-1, keepdims=True)
        p = jnp.exp(s)
        p = p / jnp.sum(p, axis=-1, keepdims=True)   # exact softmax (torch parity)
        ctx = jnp.dot(p, v[:, lo:hi], preferred_element_type=jnp.float32)   # [R, HD]
        attn = attn + jnp.dot(ctx, w_ref[lo:hi, 3 * d:4 * d],
                              preferred_element_type=jnp.float32)
    attn = attn + bo

    # ---- residual + layer norm 1 (post-norm) ----
    h1 = _layer_norm(attn + x, n1w, n1b, eps)

    # ---- feed-forward + residual + layer norm 2 ----
    ff = jnp.dot(h1, w_ref[:, 4 * d:4 * d + f],
                 preferred_element_type=jnp.float32) + b1
    ff = jax.nn.gelu(ff, approximate=False) if use_gelu else jnp.maximum(ff, 0.0)
    ff = jnp.dot(ff, w2_ref[...], preferred_element_type=jnp.float32) + b2
    out = _layer_norm(h1 + ff, n2w, n2b, eps)

    # Toy D=32 -> masked partial store (2 KiB); not worth a relayout repack.
    o_ref[...] = out.astype(o_ref.dtype)


def fsmt_encoder_layer_bt(hidden_states, w_big, w2_t, vec, *,
                          num_heads=H, eps=EPS, use_gelu=USE_GELU):
    """hidden_states: [B, S, D] f32.  Returns [B, S, D].

    The original module returns (hidden_states, attention_mask); the mask is
    passed through unchanged (None on this path), so only hidden_states is
    returned here.
    """
    Bx, Sx, Dx = hidden_states.shape
    R = Bx * Sx
    x2d = hidden_states.reshape(R, Dx)               # collapse batch into rows

    kernel = functools.partial(encoder_layer_kernel, seq_len=Sx,
                               num_heads=num_heads, eps=eps, use_gelu=use_gelu)

    def full(shape):                                  # whole-array block
        return pl.BlockSpec(shape, lambda i: (0,) * len(shape))

    out = pl.pallas_call(
        kernel,
        out_shape=jax.ShapeDtypeStruct((R, Dx), hidden_states.dtype),
        grid_spec=pltpu.PrefetchScalarGridSpec(
            num_scalar_prefetch=0,
            grid=(1,),                                # single step: 16 rows total
            in_specs=[
                full((R, Dx)),                        # x slab
                full(w_big.shape),                    # Wq^T|Wk^T|Wv^T|Wo^T|W1^T
                full(w2_t.shape),                     # W2^T
                full(vec.shape),                      # packed bias / LN vectors
            ],
            out_specs=full((R, Dx)),
        ),
        compiler_params=pltpu.CompilerParams(
            dimension_semantics=("arbitrary",)),
    )(x2d, w_big, w2_t, vec)

    return out.reshape(Bx, Sx, Dx)


# ---------------- pure-JAX reference (PyTorch-layout params) ----------------
def reference(x, raw, *, use_gelu=USE_GELU):
    (ipw, ipb, opw, opb, l1w, l1b, l2w, l2b, n1w, n1b, n2w, n2b) = raw
    Bx, Sx, Dx = x.shape
    qkv = x @ ipw.T + ipb
    q, k, v = jnp.split(qkv, 3, axis=-1)

    def heads(t):
        return t.reshape(Bx, Sx, H, HD).transpose(0, 2, 1, 3)

    q, k, v = heads(q), heads(k), heads(v)
    s = jnp.einsum('bhqd,bhkd->bhqk', q, k) / math.sqrt(HD)
    p = jax.nn.softmax(s, axis=-1)
    a = jnp.einsum('bhqk,bhkd->bhqd', p, v).transpose(0, 2, 1, 3) \
          .reshape(Bx, Sx, Dx)
    a = a @ opw.T + opb

    def ln(t, w, b):
        mu = t.mean(-1, keepdims=True)
        var = ((t - mu) ** 2).mean(-1, keepdims=True)
        return (t - mu) / jnp.sqrt(var + EPS) * w + b

    h1 = ln(a + x, n1w, n1b)
    f = h1 @ l1w.T + l1b
    f = jax.nn.gelu(f, approximate=False) if use_gelu else jax.nn.relu(f)
    return ln(h1 + f @ l2w.T + l2b, n2w, n2b)


if __name__ == "__main__":
    key = jax.random.PRNGKey(0)
    ks = jax.random.split(key, 16)

    # Deterministic synthetic parameters in the PyTorch (out, in) layout.
    q_w = jax.random.normal(ks[0], (D, D), jnp.float32) * 0.05
    k_w = jax.random.normal(ks[1], (D, D), jnp.float32) * 0.05
    v_w = jax.random.normal(ks[2], (D, D), jnp.float32) * 0.05
    in_proj_weight = jnp.concatenate([q_w, k_w, v_w], axis=0)        # [3D, D]
    in_proj_bias = jax.random.normal(ks[3], (3 * D,), jnp.float32) * 0.02
    out_proj_weight = jax.random.normal(ks[4], (D, D), jnp.float32) * 0.05
    out_proj_bias = jax.random.normal(ks[5], (D,), jnp.float32) * 0.02
    linear1_weight = jax.random.normal(ks[6], (F, D), jnp.float32) * 0.05
    linear1_bias = jax.random.normal(ks[7], (F,), jnp.float32) * 0.02
    linear2_weight = jax.random.normal(ks[8], (D, F), jnp.float32) * 0.05
    linear2_bias = jax.random.normal(ks[9], (D,), jnp.float32) * 0.02
    norm1_weight = jnp.ones((D,), jnp.float32) + 0.01 * jax.random.normal(ks[10], (D,))
    norm1_bias = 0.01 * jax.random.normal(ks[11], (D,))
    norm2_weight = jnp.ones((D,), jnp.float32) + 0.01 * jax.random.normal(ks[12], (D,))
    norm2_bias = 0.01 * jax.random.normal(ks[13], (D,))

    raw = (in_proj_weight, in_proj_bias, out_proj_weight, out_proj_bias,
           linear1_weight, linear1_bias, linear2_weight, linear2_bias,
           norm1_weight, norm1_bias, norm2_weight, norm2_bias)

    # ---- kernel-side packing: 4 inputs total ----
    # One [D, 3D+D+F] = [32, 256] weight block: Wq^T | Wk^T | Wv^T | Wout^T | W1^T.
    w_big = jnp.concatenate(
        [in_proj_weight.T, out_proj_weight.T, linear1_weight.T], axis=1)
    w2_t = linear2_weight.T                                           # [F, D]

    # One (16, 128) block holding all bias / layernorm vectors (lane-0 per row).
    def pad_row(vv, width=128):
        return jnp.pad(vv.astype(jnp.float32), (0, width - vv.shape[0]))

    q_b, k_b, v_b = (in_proj_bias[0:D], in_proj_bias[D:2 * D],
                     in_proj_bias[2 * D:3 * D])
    vec_rows = [pad_row(q_b), pad_row(k_b), pad_row(v_b), pad_row(out_proj_bias),
                pad_row(norm1_weight), pad_row(norm1_bias),
                pad_row(linear1_bias), pad_row(linear2_bias),
                pad_row(norm2_weight), pad_row(norm2_bias)]
    vec_rows += [jnp.zeros((128,), jnp.float32)] * (16 - len(vec_rows))
    vec = jnp.stack(vec_rows)                                         # [16, 128]

    hidden_states = jax.random.normal(ks[14], (B, S, D), jnp.float32)

    out = fsmt_encoder_layer_bt(hidden_states, w_big, w2_t, vec)
    out = jax.block_until_ready(out)

    ref = reference(hidden_states, raw)
    # Exact softmax in-kernel -> parity is at f32 rounding level; tolerance
    # kept at 1e-4 only for margin against accumulation-order differences.
    np.testing.assert_allclose(np.asarray(out), np.asarray(ref),
                               rtol=1e-4, atol=1e-4)
    print("KERNEL_OK")
</pallas_src>

<mosaic_0001>
module attributes {stable_mosaic.version = 11 : i64} {
  func.func @encoder_layer_kernel(%arg0: i32, %arg1: memref<16x32xf32, #tpu.memory_space<vmem>>, %arg2: memref<32x256xf32, #tpu.memory_space<vmem>>, %arg3: memref<128x32xf32, #tpu.memory_space<vmem>>, %arg4: memref<16x128xf32, #tpu.memory_space<vmem>>, %arg5: memref<16x32xf32, #tpu.memory_space<vmem>>) attributes {dimension_semantics = [#tpu.dimension_semantics<arbitrary>], iteration_bounds = array<i64: 1>, scalar_prefetch = 0 : i64, scratch_operands = 0 : i64, tpu.core_type = #tpu.core_type<tc>, window_params = [{pipeline_mode = #tpu.pipeline_mode<synchronous>, transform_indices = @transform_0, window_bounds = array<i64: 16, 32>}, {pipeline_mode = #tpu.pipeline_mode<synchronous>, transform_indices = @transform_1, window_bounds = array<i64: 32, 256>}, {pipeline_mode = #tpu.pipeline_mode<synchronous>, transform_indices = @transform_2, window_bounds = array<i64: 128, 32>}, {pipeline_mode = #tpu.pipeline_mode<synchronous>, transform_indices = @transform_3, window_bounds = array<i64: 16, 128>}, {pipeline_mode = #tpu.pipeline_mode<synchronous>, transform_indices = @transform_4, window_bounds = array<i64: 16, 32>}]} {
    %c0 = arith.constant 0 : index
    %c0_0 = arith.constant 0 : index
    %0 = vector.load %arg1[%c0, %c0_0] : memref<16x32xf32, #tpu.memory_space<vmem>>, vector<16x32xf32>
    %c0_1 = arith.constant 0 : index
    %c0_2 = arith.constant 0 : index
    %1 = vector.load %arg4[%c0_1, %c0_2] : memref<16x128xf32, #tpu.memory_space<vmem>>, vector<16x128xf32>
    %2 = vector.extract_strided_slice %1 {offsets = [0, 0], sizes = [1, 32], strides = [1, 1]} : vector<16x128xf32> to vector<1x32xf32>
    %3 = vector.extract_strided_slice %1 {offsets = [1, 0], sizes = [1, 32], strides = [1, 1]} : vector<16x128xf32> to vector<1x32xf32>
    %4 = vector.extract_strided_slice %1 {offsets = [2, 0], sizes = [1, 32], strides = [1, 1]} : vector<16x128xf32> to vector<1x32xf32>
    %5 = vector.extract_strided_slice %1 {offsets = [3, 0], sizes = [1, 32], strides = [1, 1]} : vector<16x128xf32> to vector<1x32xf32>
    %6 = vector.extract_strided_slice %1 {offsets = [4, 0], sizes = [1, 32], strides = [1, 1]} : vector<16x128xf32> to vector<1x32xf32>
    %7 = vector.extract_strided_slice %1 {offsets = [5, 0], sizes = [1, 32], strides = [1, 1]} : vector<16x128xf32> to vector<1x32xf32>
    %8 = vector.extract_strided_slice %1 {offsets = [6, 0], sizes = [1, 128], strides = [1, 1]} : vector<16x128xf32> to vector<1x128xf32>
    %9 = vector.extract_strided_slice %1 {offsets = [7, 0], sizes = [1, 32], strides = [1, 1]} : vector<16x128xf32> to vector<1x32xf32>
    %10 = vector.extract_strided_slice %1 {offsets = [8, 0], sizes = [1, 32], strides = [1, 1]} : vector<16x128xf32> to vector<1x32xf32>
    %11 = vector.extract_strided_slice %1 {offsets = [9, 0], sizes = [1, 32], strides = [1, 1]} : vector<16x128xf32> to vector<1x32xf32>
    %c0_3 = arith.constant 0 : index
    %c0_4 = arith.constant 0 : index
    %12 = vector.load %arg2[%c0_3, %c0_4] : memref<32x256xf32, #tpu.memory_space<vmem>>, vector<32x32xf32>
    %cst = arith.constant dense<0.000000e+00> : vector<16x32xf32>
    %13 = tpu.matmul %0, %12, %cst {dimension_numbers = #tpu.dot_dimension_numbers<[1], [0], [0], [1], [0, 0, 1, 1], [], []>} : vector<16x32xf32>, vector<32x32xf32>, vector<16x32xf32> -> vector<16x32xf32>
    %14 = vector.broadcast %2 : vector<1x32xf32> to vector<16x32xf32>
    %15 = arith.addf %13, %14 : vector<16x32xf32>
    %cst_5 = arith.constant 0.353553385 : f32
    %16 = vector.broadcast %cst_5 : f32 to vector<16x32xf32>
    %17 = arith.mulf %15, %16 : vector<16x32xf32>
    %c0_6 = arith.constant 0 : index
    %c32 = arith.constant 32 : index
    %18 = vector.load %arg2[%c0_6, %c32] : memref<32x256xf32, #tpu.memory_space<vmem>>, vector<32x32xf32>
    %cst_7 = arith.constant dense<0.000000e+00> : vector<16x32xf32>
    %19 = tpu.matmul %0, %18, %cst_7 {dimension_numbers = #tpu.dot_dimension_numbers<[1], [0], [0], [1], [0, 0, 1, 1], [], []>} : vector<16x32xf32>, vector<32x32xf32>, vector<16x32xf32> -> vector<16x32xf32>
    %20 = vector.broadcast %3 : vector<1x32xf32> to vector<16x32xf32>
    %21 = arith.addf %19, %20 : vector<16x32xf32>
    %c0_8 = arith.constant 0 : index
    %c64 = arith.constant 64 : index
    %22 = vector.load %arg2[%c0_8, %c64] : memref<32x256xf32, #tpu.memory_space<vmem>>, vector<32x32xf32>
    %cst_9 = arith.constant dense<0.000000e+00> : vector<16x32xf32>
    %23 = tpu.matmul %0, %22, %cst_9 {dimension_numbers = #tpu.dot_dimension_numbers<[1], [0], [0], [1], [0, 0, 1, 1], [], []>} : vector<16x32xf32>, vector<32x32xf32>, vector<16x32xf32> -> vector<16x32xf32>
    %24 = vector.broadcast %4 : vector<1x32xf32> to vector<16x32xf32>
    %25 = arith.addf %23, %24 : vector<16x32xf32>
    %26 = tpu.transpose %21, [1, 0] : vector<16x32xf32> -> vector<32x16xf32>
    %27 = tpu.iota {dimensions = array<i32: 0>} : vector<16x16xi32>
    %28 = arith.sitofp %27 : vector<16x16xi32> to vector<16x16xf32>
    %29 = tpu.iota {dimensions = array<i32: 1>} : vector<16x16xi32>
    %30 = arith.sitofp %29 : vector<16x16xi32> to vector<16x16xf32>
    %cst_10 = arith.constant 5.000000e-01 : f32
    %31 = vector.broadcast %cst_10 : f32 to vector<16x16xf32>
    %32 = arith.addf %28, %31 : vector<16x16xf32>
    %cst_11 = arith.constant 1.250000e-01 : f32
    %33 = vector.broadcast %cst_11 : f32 to vector<16x16xf32>
    %34 = arith.mulf %32, %33 : vector<16x16xf32>
    %35 = math.floor %34 : vector<16x16xf32>
    %cst_12 = arith.constant 5.000000e-01 : f32
    %36 = vector.broadcast %cst_12 : f32 to vector<16x16xf32>
    %37 = arith.addf %30, %36 : vector<16x16xf32>
    %cst_13 = arith.constant 1.250000e-01 : f32
    %38 = vector.broadcast %cst_13 : f32 to vector<16x16xf32>
    %39 = arith.mulf %37, %38 : vector<16x16xf32>
    %40 = math.floor %39 : vector<16x16xf32>
    %41 = arith.cmpf oeq, %35, %40 : vector<16x16xf32>
    %cst_14 = arith.constant 0.000000e+00 : f32
    %cst_15 = arith.constant -1.000000e+30 : f32
    %42 = vector.broadcast %cst_14 : f32 to vector<16x16xf32>
    %43 = vector.broadcast %cst_15 : f32 to vector<16x16xf32>
    %44 = arith.select %41, %42, %43 : vector<16x16xi1>, vector<16x16xf32>
    %cst_16 = arith.constant 0.000000e+00 : f32
    %45 = vector.broadcast %cst_16 : f32 to vector<16x32xf32>
    %46 = vector.extract_strided_slice %17 {offsets = [0, 0], sizes = [16, 8], strides = [1, 1]} : vector<16x32xf32> to vector<16x8xf32>
    %47 = vector.extract_strided_slice %26 {offsets = [0, 0], sizes = [8, 16], strides = [1, 1]} : vector<32x16xf32> to vector<8x16xf32>
    %cst_17 = arith.constant dense<0.000000e+00> : vector<16x16xf32>
    %48 = tpu.matmul %46, %47, %cst_17 {dimension_numbers = #tpu.dot_dimension_numbers<[1], [0], [0], [1], [0, 0, 1, 1], [], []>} : vector<16x8xf32>, vector<8x16xf32>, vector<16x16xf32> -> vector<16x16xf32>
    %49 = arith.addf %48, %44 : vector<16x16xf32>
    %cst_18 = arith.constant dense<0xFF800000> : vector<16xf32>
    %50 = vector.multi_reduction <maximumf>, %49, %cst_18 [1] : vector<16x16xf32> to vector<16xf32>
    %51 = vector.shape_cast %50 : vector<16xf32> to vector<16x1xf32>
    %52 = vector.broadcast %51 : vector<16x1xf32> to vector<16x16xf32>
    %53 = arith.subf %49, %52 : vector<16x16xf32>
    %54 = math.exp %53 : vector<16x16xf32>
    %cst_19 = arith.constant dense<0.000000e+00> : vector<16xf32>
    %55 = vector.multi_reduction <add>, %54, %cst_19 [1] : vector<16x16xf32> to vector<16xf32>
    %56 = vector.shape_cast %55 : vector<16xf32> to vector<16x1xf32>
    %57 = vector.broadcast %56 : vector<16x1xf32> to vector<16x16xf32>
    %58 = arith.divf %54, %57 : vector<16x16xf32>
    %59 = vector.extract_strided_slice %25 {offsets = [0, 0], sizes = [16, 8], strides = [1, 1]} : vector<16x32xf32> to vector<16x8xf32>
    %cst_20 = arith.constant dense<0.000000e+00> : vector<16x8xf32>
    %60 = tpu.matmul %58, %59, %cst_20 {dimension_numbers = #tpu.dot_dimension_numbers<[1], [0], [0], [1], [0, 0, 1, 1], [], []>} : vector<16x16xf32>, vector<16x8xf32>, vector<16x8xf32> -> vector<16x8xf32>
    %c0_21 = arith.constant 0 : index
    %c96 = arith.constant 96 : index
    %61 = vector.load %arg2[%c0_21, %c96] : memref<32x256xf32, #tpu.memory_space<vmem>>, vector<8x32xf32>
    %cst_22 = arith.constant dense<0.000000e+00> : vector<16x32xf32>
    %62 = tpu.matmul %60, %61, %cst_22 {dimension_numbers = #tpu.dot_dimension_numbers<[1], [0], [0], [1], [0, 0, 1, 1], [], []>} : vector<16x8xf32>, vector<8x32xf32>, vector<16x32xf32> -> vector<16x32xf32>
    %63 = arith.addf %45, %62 : vector<16x32xf32>
    %64 = vector.extract_strided_slice %17 {offsets = [0, 8], sizes = [16, 8], strides = [1, 1]} : vector<16x32xf32> to vector<16x8xf32>
    %65 = vector.extract_strided_slice %26 {offsets = [8, 0], sizes = [8, 16], strides = [1, 1]} : vector<32x16xf32> to vector<8x16xf32>
    %cst_23 = arith.constant dense<0.000000e+00> : vector<16x16xf32>
    %66 = tpu.matmul %64, %65, %cst_23 {dimension_numbers = #tpu.dot_dimension_numbers<[1], [0], [0], [1], [0, 0, 1, 1], [], []>} : vector<16x8xf32>, vector<8x16xf32>, vector<16x16xf32> -> vector<16x16xf32>
    %67 = arith.addf %66, %44 : vector<16x16xf32>
    %cst_24 = arith.constant dense<0xFF800000> : vector<16xf32>
    %68 = vector.multi_reduction <maximumf>, %67, %cst_24 [1] : vector<16x16xf32> to vector<16xf32>
    %69 = vector.shape_cast %68 : vector<16xf32> to vector<16x1xf32>
    %70 = vector.broadcast %69 : vector<16x1xf32> to vector<16x16xf32>
    %71 = arith.subf %67, %70 : vector<16x16xf32>
    %72 = math.exp %71 : vector<16x16xf32>
    %cst_25 = arith.constant dense<0.000000e+00> : vector<16xf32>
    %73 = vector.multi_reduction <add>, %72, %cst_25 [1] : vector<16x16xf32> to vector<16xf32>
    %74 = vector.shape_cast %73 : vector<16xf32> to vector<16x1xf32>
    %75 = vector.broadcast %74 : vector<16x1xf32> to vector<16x16xf32>
    %76 = arith.divf %72, %75 : vector<16x16xf32>
    %77 = vector.extract_strided_slice %25 {offsets = [0, 8], sizes = [16, 8], strides = [1, 1]} : vector<16x32xf32> to vector<16x8xf32>
    %cst_26 = arith.constant dense<0.000000e+00> : vector<16x8xf32>
    %78 = tpu.matmul %76, %77, %cst_26 {dimension_numbers = #tpu.dot_dimension_numbers<[1], [0], [0], [1], [0, 0, 1, 1], [], []>} : vector<16x16xf32>, vector<16x8xf32>, vector<16x8xf32> -> vector<16x8xf32>
    %c8 = arith.constant 8 : index
    %c96_27 = arith.constant 96 : index
    %79 = vector.load %arg2[%c8, %c96_27] : memref<32x256xf32, #tpu.memory_space<vmem>>, vector<8x32xf32>
    %cst_28 = arith.constant dense<0.000000e+00> : vector<16x32xf32>
    %80 = tpu.matmul %78, %79, %cst_28 {dimension_numbers = #tpu.dot_dimension_numbers<[1], [0], [0], [1], [0, 0, 1, 1], [], []>} : vector<16x8xf32>, vector<8x32xf32>, vector<16x32xf32> -> vector<16x32xf32>
    %81 = arith.addf %63, %80 : vector<16x32xf32>
    %82 = vector.extract_strided_slice %17 {offsets = [0, 16], sizes = [16, 8], strides = [1, 1]} : vector<16x32xf32> to vector<16x8xf32>
    %83 = vector.extract_strided_slice %26 {offsets = [16, 0], sizes = [8, 16], strides = [1, 1]} : vector<32x16xf32> to vector<8x16xf32>
    %cst_29 = arith.constant dense<0.000000e+00> : vector<16x16xf32>
    %84 = tpu.matmul %82, %83, %cst_29 {dimension_numbers = #tpu.dot_dimension_numbers<[1], [0], [0], [1], [0, 0, 1, 1], [], []>} : vector<16x8xf32>, vector<8x16xf32>, vector<16x16xf32> -> vector<16x16xf32>
    %85 = arith.addf %84, %44 : vector<16x16xf32>
    %cst_30 = arith.constant dense<0xFF800000> : vector<16xf32>
    %86 = vector.multi_reduction <maximumf>, %85, %cst_30 [1] : vector<16x16xf32> to vector<16xf32>
    %87 = vector.shape_cast %86 : vector<16xf32> to vector<16x1xf32>
    %88 = vector.broadcast %87 : vector<16x1xf32> to vector<16x16xf32>
    %89 = arith.subf %85, %88 : vector<16x16xf32>
    %90 = math.exp %89 : vector<16x16xf32>
    %cst_31 = arith.constant dense<0.000000e+00> : vector<16xf32>
    %91 = vector.multi_reduction <add>, %90, %cst_31 [1] : vector<16x16xf32> to vector<16xf32>
    %92 = vector.shape_cast %91 : vector<16xf32> to vector<16x1xf32>
    %93 = vector.broadcast %92 : vector<16x1xf32> to vector<16x16xf32>
    %94 = arith.divf %90, %93 : vector<16x16xf32>
    %95 = vector.extract_strided_slice %25 {offsets = [0, 16], sizes = [16, 8], strides = [1, 1]} : vector<16x32xf32> to vector<16x8xf32>
    %cst_32 = arith.constant dense<0.000000e+00> : vector<16x8xf32>
    %96 = tpu.matmul %94, %95, %cst_32 {dimension_numbers = #tpu.dot_dimension_numbers<[1], [0], [0], [1], [0, 0, 1, 1], [], []>} : vector<16x16xf32>, vector<16x8xf32>, vector<16x8xf32> -> vector<16x8xf32>
    %c16 = arith.constant 16 : index
    %c96_33 = arith.constant 96 : index
    %97 = vector.load %arg2[%c16, %c96_33] : memref<32x256xf32, #tpu.memory_space<vmem>>, vector<8x32xf32>
    %cst_34 = arith.constant dense<0.000000e+00> : vector<16x32xf32>
    %98 = tpu.matmul %96, %97, %cst_34 {dimension_numbers = #tpu.dot_dimension_numbers<[1], [0], [0], [1], [0, 0, 1, 1], [], []>} : vector<16x8xf32>, vector<8x32xf32>, vector<16x32xf32> -> vector<16x32xf32>
    %99 = arith.addf %81, %98 : vector<16x32xf32>
    %100 = vector.extract_strided_slice %17 {offsets = [0, 24], sizes = [16, 8], strides = [1, 1]} : vector<16x32xf32> to vector<16x8xf32>
    %101 = vector.extract_strided_slice %26 {offsets = [24, 0], sizes = [8, 16], strides = [1, 1]} : vector<32x16xf32> to vector<8x16xf32>
    %cst_35 = arith.constant dense<0.000000e+00> : vector<16x16xf32>
    %102 = tpu.matmul %100, %101, %cst_35 {dimension_numbers = #tpu.dot_dimension_numbers<[1], [0], [0], [1], [0, 0, 1, 1], [], []>} : vector<16x8xf32>, vector<8x16xf32>, vector<16x16xf32> -> vector<16x16xf32>
    %103 = arith.addf %102, %44 : vector<16x16xf32>
    %cst_36 = arith.constant dense<0xFF800000> : vector<16xf32>
    %104 = vector.multi_reduction <maximumf>, %103, %cst_36 [1] : vector<16x16xf32> to vector<16xf32>
    %105 = vector.shape_cast %104 : vector<16xf32> to vector<16x1xf32>
    %106 = vector.broadcast %105 : vector<16x1xf32> to vector<16x16xf32>
    %107 = arith.subf %103, %106 : vector<16x16xf32>
    %108 = math.exp %107 : vector<16x16xf32>
    %cst_37 = arith.constant dense<0.000000e+00> : vector<16xf32>
    %109 = vector.multi_reduction <add>, %108, %cst_37 [1] : vector<16x16xf32> to vector<16xf32>
    %110 = vector.shape_cast %109 : vector<16xf32> to vector<16x1xf32>
    %111 = vector.broadcast %110 : vector<16x1xf32> to vector<16x16xf32>
    %112 = arith.divf %108, %111 : vector<16x16xf32>
    %113 = vector.extract_strided_slice %25 {offsets = [0, 24], sizes = [16, 8], strides = [1, 1]} : vector<16x32xf32> to vector<16x8xf32>
    %cst_38 = arith.constant dense<0.000000e+00> : vector<16x8xf32>
    %114 = tpu.matmul %112, %113, %cst_38 {dimension_numbers = #tpu.dot_dimension_numbers<[1], [0], [0], [1], [0, 0, 1, 1], [], []>} : vector<16x16xf32>, vector<16x8xf32>, vector<16x8xf32> -> vector<16x8xf32>
    %c24 = arith.constant 24 : index
    %c96_39 = arith.constant 96 : index
    %115 = vector.load %arg2[%c24, %c96_39] : memref<32x256xf32, #tpu.memory_space<vmem>>, vector<8x32xf32>
    %cst_40 = arith.constant dense<0.000000e+00> : vector<16x32xf32>
    %116 = tpu.matmul %114, %115, %cst_40 {dimension_numbers = #tpu.dot_dimension_numbers<[1], [0], [0], [1], [0, 0, 1, 1], [], []>} : vector<16x8xf32>, vector<8x32xf32>, vector<16x32xf32> -> vector<16x32xf32>
    %117 = arith.addf %99, %116 : vector<16x32xf32>
    %118 = vector.broadcast %5 : vector<1x32xf32> to vector<16x32xf32>
    %119 = arith.addf %117, %118 : vector<16x32xf32>
    %120 = arith.addf %119, %0 : vector<16x32xf32>
    %cst_41 = arith.constant dense<0.000000e+00> : vector<16xf32>
    %121 = vector.multi_reduction <add>, %120, %cst_41 [1] : vector<16x32xf32> to vector<16xf32>
    %122 = vector.shape_cast %121 : vector<16xf32> to vector<16x1xf32>
    %cst_42 = arith.constant 3.200000e+01 : f32
    %123 = vector.broadcast %cst_42 : f32 to vector<16x1xf32>
    %124 = arith.divf %122, %123 : vector<16x1xf32>
    %125 = vector.broadcast %124 : vector<16x1xf32> to vector<16x32xf32>
    %126 = arith.subf %120, %125 : vector<16x32xf32>
    %127 = arith.mulf %126, %126 : vector<16x32xf32>
    %cst_43 = arith.constant dense<0.000000e+00> : vector<16xf32>
    %128 = vector.multi_reduction <add>, %127, %cst_43 [1] : vector<16x32xf32> to vector<16xf32>
    %129 = vector.shape_cast %128 : vector<16xf32> to vector<16x1xf32>
    %cst_44 = arith.constant 3.200000e+01 : f32
    %130 = vector.broadcast %cst_44 : f32 to vector<16x1xf32>
    %131 = arith.divf %129, %130 : vector<16x1xf32>
    %132 = vector.broadcast %124 : vector<16x1xf32> to vector<16x32xf32>
    %133 = arith.subf %120, %132 : vector<16x32xf32>
    %cst_45 = arith.constant 9.99999974E-6 : f32
    %134 = vector.broadcast %cst_45 : f32 to vector<16x1xf32>
    %135 = arith.addf %131, %134 : vector<16x1xf32>
    %136 = math.rsqrt %135 : vector<16x1xf32>
    %137 = vector.broadcast %136 : vector<16x1xf32> to vector<16x32xf32>
    %138 = arith.mulf %133, %137 : vector<16x32xf32>
    %139 = vector.broadcast %6 : vector<1x32xf32> to vector<16x32xf32>
    %140 = arith.mulf %138, %139 : vector<16x32xf32>
    %141 = vector.broadcast %7 : vector<1x32xf32> to vector<16x32xf32>
    %142 = arith.addf %140, %141 : vector<16x32xf32>
    %c0_46 = arith.constant 0 : index
    %c128 = arith.constant 128 : index
    %143 = vector.load %arg2[%c0_46, %c128] : memref<32x256xf32, #tpu.memory_space<vmem>>, vector<32x128xf32>
    %cst_47 = arith.constant dense<0.000000e+00> : vector<16x128xf32>
    %144 = tpu.matmul %142, %143, %cst_47 {dimension_numbers = #tpu.dot_dimension_numbers<[1], [0], [0], [1], [0, 0, 1, 1], [], []>} : vector<16x32xf32>, vector<32x128xf32>, vector<16x128xf32> -> vector<16x128xf32>
    %145 = vector.broadcast %8 : vector<1x128xf32> to vector<16x128xf32>
    %146 = arith.addf %144, %145 : vector<16x128xf32>
    %cst_48 = arith.constant 0.000000e+00 : f32
    %147 = vector.broadcast %cst_48 : f32 to vector<16x128xf32>
    %148 = arith.maximumf %146, %147 : vector<16x128xf32>
    %c0_49 = arith.constant 0 : index
    %c0_50 = arith.constant 0 : index
    %149 = vector.load %arg3[%c0_49, %c0_50] : memref<128x32xf32, #tpu.memory_space<vmem>>, vector<128x32xf32>
    %cst_51 = arith.constant dense<0.000000e+00> : vector<16x32xf32>
    %150 = tpu.matmul %148, %149, %cst_51 {dimension_numbers = #tpu.dot_dimension_numbers<[1], [0], [0], [1], [0, 0, 1, 1], [], []>} : vector<16x128xf32>, vector<128x32xf32>, vector<16x32xf32> -> vector<16x32xf32>
    %151 = vector.broadcast %9 : vector<1x32xf32> to vector<16x32xf32>
    %152 = arith.addf %150, %151 : vector<16x32xf32>
    %153 = arith.addf %142, %152 : vector<16x32xf32>
    %cst_52 = arith.constant dense<0.000000e+00> : vector<16xf32>
    %154 = vector.multi_reduction <add>, %153, %cst_52 [1] : vector<16x32xf32> to vector<16xf32>
    %155 = vector.shape_cast %154 : vector<16xf32> to vector<16x1xf32>
    %cst_53 = arith.constant 3.200000e+01 : f32
    %156 = vector.broadcast %cst_53 : f32 to vector<16x1xf32>
    %157 = arith.divf %155, %156 : vector<16x1xf32>
    %158 = vector.broadcast %157 : vector<16x1xf32> to vector<16x32xf32>
    %159 = arith.subf %153, %158 : vector<16x32xf32>
    %160 = arith.mulf %159, %159 : vector<16x32xf32>
    %cst_54 = arith.constant dense<0.000000e+00> : vector<16xf32>
    %161 = vector.multi_reduction <add>, %160, %cst_54 [1] : vector<16x32xf32> to vector<16xf32>
    %162 = vector.shape_cast %161 : vector<16xf32> to vector<16x1xf32>
    %cst_55 = arith.constant 3.200000e+01 : f32
    %163 = vector.broadcast %cst_55 : f32 to vector<16x1xf32>
    %164 = arith.divf %162, %163 : vector<16x1xf32>
    %165 = vector.broadcast %157 : vector<16x1xf32> to vector<16x32xf32>
    %166 = arith.subf %153, %165 : vector<16x32xf32>
    %cst_56 = arith.constant 9.99999974E-6 : f32
    %167 = vector.broadcast %cst_56 : f32 to vector<16x1xf32>
    %168 = arith.addf %164, %167 : vector<16x1xf32>
    %169 = math.rsqrt %168 : vector<16x1xf32>
    %170 = vector.broadcast %169 : vector<16x1xf32> to vector<16x32xf32>
    %171 = arith.mulf %166, %170 : vector<16x32xf32>
    %172 = vector.broadcast %10 : vector<1x32xf32> to vector<16x32xf32>
    %173 = arith.mulf %171, %172 : vector<16x32xf32>
    %174 = vector.broadcast %11 : vector<1x32xf32> to vector<16x32xf32>
    %175 = arith.addf %173, %174 : vector<16x32xf32>
    %c0_57 = arith.constant 0 : index
    %c0_58 = arith.constant 0 : index
    %176 = vector.load %arg5[%c0_57, %c0_58] : memref<16x32xf32, #tpu.memory_space<vmem>>, vector<16x32xf32>
    tpu.vector_store %arg5[%c0_57, %c0_58], %175 {strides = array<i32>} : memref<16x32xf32, #tpu.memory_space<vmem>>, vector<16x32xf32>,
    return
  }
  func.func @transform_0(%arg0: i32) -> (i32, i32) {
    %c0_i32 = arith.constant 0 : i32
    %c0_i32_0 = arith.constant 0 : i32
    %c0_i32_1 = arith.constant 0 : i32
    return %c0_i32, %c0_i32_0 : i32, i32
  }
  func.func @transform_1(%arg0: i32) -> (i32, i32) {
    %c0_i32 = arith.constant 0 : i32
    %c0_i32_0 = arith.constant 0 : i32
    %c0_i32_1 = arith.constant 0 : i32
    return %c0_i32, %c0_i32_0 : i32, i32
  }
  func.func @transform_2(%arg0: i32) -> (i32, i32) {
    %c0_i32 = arith.constant 0 : i32
    %c0_i32_0 = arith.constant 0 : i32
    %c0_i32_1 = arith.constant 0 : i32
    return %c0_i32, %c0_i32_0 : i32, i32
  }
  func.func @transform_3(%arg0: i32) -> (i32, i32) {
    %c0_i32 = arith.constant 0 : i32
    %c0_i32_0 = arith.constant 0 : i32
    %c0_i32_1 = arith.constant 0 : i32
    return %c0_i32, %c0_i32_0 : i32, i32
  }
  func.func @transform_4(%arg0: i32) -> (i32, i32) {
    %c0_i32 = arith.constant 0 : i32
    %c0_i32_0 = arith.constant 0 : i32
    %c0_i32_1 = arith.constant 0 : i32
    return %c0_i32, %c0_i32_0 : i32, i32
  }
}

</mosaic_0001>

<llo_original>
// kernel: tpu_custom_call.1
$region0: #{tpu_custom_call.1}
  #allocation0 [shape = 'u32[]', space=smem, size = 0x4, offset = 0x4, fixed_abs, tag = 'smem constant byte address 0x4 - core index']
  #allocation1 [shape = 'u32[144,128]{1,0:T(1,128)}', space=vmem, size = 0x12000, scoped, tag = 'internal scratch']
  %s0 = inlined_call_operand.vmem [shape: f32[16,32], index: 0, kind: input, shape index: {}]
  %s1 = inlined_call_operand.vmem [shape: f32[32,256], index: 1, kind: input, shape index: {}]
  %s2 = inlined_call_operand.vmem [shape: f32[128,32], index: 2, kind: input, shape index: {}]
  %s3 = inlined_call_operand.vmem [shape: f32[16,128], index: 3, kind: input, shape index: {}]
  %s4 = inlined_call_operand.hbm [shape: f32[16,32], index: 4, kind: output, shape index: {}]
  %s5 = sld [smem:[#allocation0]]
  $region26: #{tpu_custom_call.1} parent=0
    _
  %s7 = ssub.s32 1, %s5
  %s8 = scalar_select 0, %s7, %s5
  $region1: #{tpu_custom_call.1} parent=0
    #allocation2 [shape = 'u8[8192]{0}', space=vmem, size = 0x2000, scoped, tag = 'output window, operand 0, single buffered']
    #allocation3 [shape = 's32[1]{0}', space=sflag, size = 0x4, scoped, tag = 'scoped memory for tpu_custom_call.1']
    %9 = vsyncpa [#allocation3], 0
    // Predicated region
    $region2: #{tpu_custom_call.1} parent=1 // pred_check
      _
    $region3: #{tpu_custom_call.1} parent=1 // pred_check_branch
      %11 = sbr.rel (0) target = $region5
    $region4: #{tpu_custom_call.1} parent=1 // pred_region
      _
    $region5: #{tpu_custom_call.1} parent=1 // pred_fallthru
      _
    // Predicated region
    $region6: #{tpu_custom_call.1} parent=1 // pred_check
      _
    $region7: #{tpu_custom_call.1} parent=1 // pred_check_branch
      %13 = sbr.rel (0) target = $region9
    $region8: #{tpu_custom_call.1} parent=1 // pred_region
      _
    $region9: #{tpu_custom_call.1} parent=1 // pred_fallthru
      _
    // Predicated region
    $region10: #{tpu_custom_call.1} parent=1 // pred_check
      _
    $region11: #{tpu_custom_call.1} parent=1 // pred_check_branch
      %15 = sbr.rel (0) target = $region13
    $region12: #{tpu_custom_call.1} parent=1 // pred_region
      _
    $region13: #{tpu_custom_call.1} parent=1 // pred_fallthru
      _
    // Predicated region
    $region14: #{tpu_custom_call.1} parent=1 // pred_check
      _
    $region15: #{tpu_custom_call.1} parent=1 // pred_check_branch
      %17 = sbr.rel (0) target = $region17
    $region16: #{tpu_custom_call.1} parent=1 // pred_region
      _
    $region17: #{tpu_custom_call.1} parent=1 // pred_fallthru
      _
    %v18 = vld [vmem:[%s0] sm:$0xff]
    %v19 = vld [vmem:[%s0 + $0x8] sm:$0xff]
    %v20 = vld [vmem:[%s3] sm:$0xff]
    %v21 = vld [vmem:[%s3 + $0x8] sm:$0xff]
    %v22 = vld [vmem:[%s1] sm:$0xff]
    %v23 = vld [vmem:[%s1 + $0x10] sm:$0xff]
    %v24 = vld [vmem:[%s1 + $0x20] sm:$0xff]
    %v25 = vld [vmem:[%s1 + $0x30] sm:$0xff]
    %v26 = vlaneseq
    %v27 = vshrl.u32 %v26, 7
    %v28 = vsub.s32 0, %v27
    %v29 = vrot.slane %v20, %v28
    %vm30 = vcmask 261120
    %v32 = vsel %vm30, %v18, 0
    %v35 = vsel %vm30, %v19, 0
    %37 = vmatprep.subr.mxu0 0.0
    %38 = vmatpush1.msra.mxu0 %v22
    %39 = vmatprep.subr.mxu0 0.0
    %40 = vmatpush1.msra.mxu0 %v23
    %41 = vmatprep.subr.mxu0 0.0
    %42 = vmatpush1.msra.mxu0 %v24
    %43 = vmatprep.subr.mxu0 0.0
    %44 = vmatpush1.msra.mxu0 %v25
    %45 = vmatprep.subr.mxu0 0.0
    %46 = vmatpush1.msra.mxu0 0.0
    %47 = vmatprep.subr.mxu0 0.0
    %48 = vmatpush1.msra.mxu0 0.0
    %49 = vmatprep.subr.mxu0 0.0
    %50 = vmatpush1.msra.mxu0 0.0
    %51 = vmatprep.subr.mxu0 0.0
    %52 = vmatpush1.msra.mxu0 0.0
    %53 = vmatprep.subr.mxu0 0.0
    %54 = vmatpush1.msra.mxu0 0.0
    %55 = vmatprep.subr.mxu0 0.0
    %56 = vmatpush1.msra.mxu0 0.0
    %57 = vmatprep.subr.mxu0 0.0
    %58 = vmatpush1.msra.mxu0 0.0
    %59 = vmatprep.subr.mxu0 0.0
    %60 = vmatpush1.msra.mxu0 0.0
    %61 = vmatprep.subr.mxu0 0.0
    %62 = vmatpush1.msra.mxu0 0.0
    %63 = vmatprep.subr.mxu0 0.0
    %64 = vmatpush1.msra.mxu0 0.0
    %65 = vmatprep.subr.mxu0 0.0
    %66 = vmatpush1.msra.mxu0 0.0
    %67 = vmatprep.subr.mxu0 0.0
    %68 = vmatpush1.msra.mxu0 0.0
    %69 = vmatprep.subr.mxu0 0.0
    %70 = vmatpush1.msra.mxu0 0.0
    %71 = vmatprep.subr.mxu0 0.0
    %72 = vmatpush1.msra.mxu0 0.0
    %73 = vmatprep.subr.mxu0 0.0
    %74 = vmatpush1.msra.mxu0 0.0
    %75 = vmatprep.subr.mxu0 0.0
    %76 = vmatpush1.msra.mxu0 0.0
    %77 = vmatprep.subr.mxu0 0.0
    %78 = vmatpush1.msra.mxu0 0.0
    %79 = vmatprep.subr.mxu0 0.0
    %80 = vmatpush1.msra.mxu0 0.0
    %81 = vmatprep.subr.mxu0 0.0
    %82 = vmatpush1.msra.mxu0 0.0
    %83 = vmatprep.subr.mxu0 0.0
    %84 = vmatpush1.msra.mxu0 0.0
    %85 = vmatprep.subr.mxu0 0.0
    %86 = vmatpush1.msra.mxu0 0.0
    %87 = vmatprep.subr.mxu0 0.0
    %88 = vmatpush1.msra.mxu0 0.0
    %89 = vmatprep.subr.mxu0 0.0
    %90 = vmatpush1.msra.mxu0 0.0
    %91 = vmatprep.subr.mxu0 0.0
    %92 = vmatpush1.msra.mxu0 0.0
    %93 = vmatprep.subr.mxu0 0.0
    %94 = vmatpush1.msra.mxu0 0.0
    %95 = vmatprep.subr.mxu0 0.0
    %96 = vmatpush1.msra.mxu0 0.0
    %97 = vmatprep.subr.mxu0 0.0
    %98 = vmatpush1.msra.mxu0 0.0
    %99 = vmatprep.subr.mxu0 0.0
    %100 = vmatpush1.msra.mxu0 0.0
    %101 = vmatprep.mubr.f32.mxu0 0.0
    %102 = vmatmul.mubr.f32.gmra.mrb[0].mxu0 %v32
    %v103 = vpop.f32.mrb[0].mxu0
    %v104 = vadd.f32 %v29, %v103
    %v105 = vpop.f32.mrb[0].mxu0
    %106 = vmatprep.mubr.f32.mxu0 0.0
    %107 = vmatmul.mubr.f32.gmra.mrb[0].mxu0 %v35
    %v108 = vpop.f32.mrb[0].mxu0
    %v109 = vadd.f32 %v29, %v108
    %v110 = vpop.f32.mrb[0].mxu0
    %111 = vdwg.mxu0
    %v112 = vmul.f32 %v104, 0.35355338
    %v113 = vmul.f32 %v109, 0.35355338
    %v114 = vlaneseq
    %v115 = vshrl.u32 %v114, 7
    %v116 = vsub.s32 1, %v115
    %v117 = vrot.slane %v20, %v116
    %122 = vrot.lane.b32.xlu0 %v22, 96
    %v123 = vpop.permute.xlu0 %122
    %124 = vrot.lane.b32.xlu0 %v23, 96
    %v125 = vpop.permute.xlu0 %124
    %126 = vrot.lane.b32.xlu0 %v24, 96
    %v127 = vpop.permute.xlu0 %126
    %128 = vrot.lane.b32.xlu0 %v25, 96
    %v129 = vpop.permute.xlu0 %128
    %134 = vmatprep.subr.mxu0 0.0
    %135 = vmatpush1.msra.mxu0 %v123
    %136 = vmatprep.subr.mxu0 0.0
    %137 = vmatpush1.msra.mxu0 %v125
    %138 = vmatprep.subr.mxu0 0.0
    %139 = vmatpush1.msra.mxu0 %v127
    %140 = vmatprep.subr.mxu0 0.0
    %141 = vmatpush1.msra.mxu0 %v129
    %142 = vmatprep.subr.mxu0 0.0
    %143 = vmatpush1.msra.mxu0 0.0
    %144 = vmatprep.subr.mxu0 0.0
    %145 = vmatpush1.msra.mxu0 0.0
    %146 = vmatprep.subr.mxu0 0.0
    %147 = vmatpush1.msra.mxu0 0.0
    %148 = vmatprep.subr.mxu0 0.0
    %149 = vmatpush1.msra.mxu0 0.0
    %150 = vmatprep.subr.mxu0 0.0
    %151 = vmatpush1.msra.mxu0 0.0
    %152 = vmatprep.subr.mxu0 0.0
    %153 = vmatpush1.msra.mxu0 0.0
    %154 = vmatprep.subr.mxu0 0.0
    %155 = vmatpush1.msra.mxu0 0.0
    %156 = vmatprep.subr.mxu0 0.0
    %157 = vmatpush1.msra.mxu0 0.0
    %158 = vmatprep.subr.mxu0 0.0
    %159 = vmatpush1.msra.mxu0 0.0
    %160 = vmatprep.subr.mxu0 0.0
    %161 = vmatpush1.msra.mxu0 0.0
    %162 = vmatprep.subr.mxu0 0.0
    %163 = vmatpush1.msra.mxu0 0.0
    %164 = vmatprep.subr.mxu0 0.0
    %165 = vmatpush1.msra.mxu0 0.0
    %166 = vmatprep.subr.mxu0 0.0
    %167 = vmatpush1.msra.mxu0 0.0
    %168 = vmatprep.subr.mxu0 0.0
    %169 = vmatpush1.msra.mxu0 0.0
    %170 = vmatprep.subr.mxu0 0.0
    %171 = vmatpush1.msra.mxu0 0.0
    %172 = vmatprep.subr.mxu0 0.0
    %173 = vmatpush1.msra.mxu0 0.0
    %174 = vmatprep.subr.mxu0 0.0
    %175 = vmatpush1.msra.mxu0 0.0
    %176 = vmatprep.subr.mxu0 0.0
    %177 = vmatpush1.msra.mxu0 0.0
    %178 = vmatprep.subr.mxu0 0.0
    %179 = vmatpush1.msra.mxu0 0.0
    %180 = vmatprep.subr.mxu0 0.0
    %181 = vmatpush1.msra.mxu0 0.0
    %182 = vmatprep.subr.mxu0 0.0
    %183 = vmatpush1.msra.mxu0 0.0
    %184 = vmatprep.subr.mxu0 0.0
    %185 = vmatpush1.msra.mxu0 0.0
    %186 = vmatprep.subr.mxu0 0.0
    %187 = vmatpush1.msra.mxu0 0.0
    %188 = vmatprep.subr.mxu0 0.0
    %189 = vmatpush1.msra.mxu0 0.0
    %190 = vmatprep.subr.mxu0 0.0
    %191 = vmatpush1.msra.mxu0 0.0
    %192 = vmatprep.subr.mxu0 0.0
    %193 = vmatpush1.msra.mxu0 0.0
    %194 = vmatprep.subr.mxu0 0.0
    %195 = vmatpush1.msra.mxu0 0.0
    %196 = vmatprep.subr.mxu0 0.0
    %197 = vmatpush1.msra.mxu0 0.0
    %198 = vmatprep.mubr.f32.mxu0 0.0
    %199 = vmatmul.mubr.f32.gmra.mrb[0].mxu0 %v32
    %v200 = vpop.f32.mrb[0].mxu0
    %v201 = vadd.f32 %v117, %v200
    %v202 = vpop.f32.mrb[0].mxu0
    %203 = vmatprep.mubr.f32.mxu0 0.0
    %204 = vmatmul.mubr.f32.gmra.mrb[0].mxu0 %v35
    %v205 = vpop.f32.mrb[0].mxu0
    %v206 = vadd.f32 %v117, %v205
    %v207 = vpop.f32.mrb[0].mxu0
    %208 = vdwg.mxu0
    %v209 = vlaneseq
    %v210 = vshrl.u32 %v209, 7
    %v211 = vsub.s32 2, %v210
    %v212 = vrot.slane %v20, %v211
    %213 = vrot.lane.b32.xlu0 %v22, 64
    %v214 = vpop.permute.xlu0 %213
    %215 = vrot.lane.b32.xlu0 %v23, 64
    %v216 = vpop.permute.xlu0 %215
    %217 = vrot.lane.b32.xlu0 %v24, 64
    %v218 = vpop.permute.xlu0 %217
    %219 = vrot.lane.b32.xlu0 %v25, 64
    %v220 = vpop.permute.xlu0 %219
    %225 = vmatprep.subr.mxu0 0.0
    %226 = vmatpush1.msra.mxu0 %v214
    %227 = vmatprep.subr.mxu0 0.0
    %228 = vmatpush1.msra.mxu0 %v216
    %229 = vmatprep.subr.mxu0 0.0
    %230 = vmatpush1.msra.mxu0 %v218
    %231 = vmatprep.subr.mxu0 0.0
    %232 = vmatpush1.msra.mxu0 %v220
    %233 = vmatprep.subr.mxu0 0.0
    %234 = vmatpush1.msra.mxu0 0.0
    %235 = vmatprep.subr.mxu0 0.0
    %236 = vmatpush1.msra.mxu0 0.0
    %237 = vmatprep.subr.mxu0 0.0
    %238 = vmatpush1.msra.mxu0 0.0
    %239 = vmatprep.subr.mxu0 0.0
    %240 = vmatpush1.msra.mxu0 0.0
    %241 = vmatprep.subr.mxu0 0.0
    %242 = vmatpush1.msra.mxu0 0.0
    %243 = vmatprep.subr.mxu0 0.0
    %244 = vmatpush1.msra.mxu0 0.0
    %245 = vmatprep.subr.mxu0 0.0
    %246 = vmatpush1.msra.mxu0 0.0
    %247 = vmatprep.subr.mxu0 0.0
    %248 = vmatpush1.msra.mxu0 0.0
    %249 = vmatprep.subr.mxu0 0.0
    %250 = vmatpush1.msra.mxu0 0.0
    %251 = vmatprep.subr.mxu0 0.0
    %252 = vmatpush1.msra.mxu0 0.0
    %253 = vmatprep.subr.mxu0 0.0
    %254 = vmatpush1.msra.mxu0 0.0
    %255 = vmatprep.subr.mxu0 0.0
    %256 = vmatpush1.msra.mxu0 0.0
    %257 = vmatprep.subr.mxu0 0.0
    %258 = vmatpush1.msra.mxu0 0.0
    %259 = vmatprep.subr.mxu0 0.0
    %260 = vmatpush1.msra.mxu0 0.0
    %261 = vmatprep.subr.mxu0 0.0
    %262 = vmatpush1.msra.mxu0 0.0
    %263 = vmatprep.subr.mxu0 0.0
    %264 = vmatpush1.msra.mxu0 0.0
    %265 = vmatprep.subr.mxu0 0.0
    %266 = vmatpush1.msra.mxu0 0.0
    %267 = vmatprep.subr.mxu0 0.0
    %268 = vmatpush1.msra.mxu0 0.0
    %269 = vmatprep.subr.mxu0 0.0
    %270 = vmatpush1.msra.mxu0 0.0
    %271 = vmatprep.subr.mxu0 0.0
    %272 = vmatpush1.msra.mxu0 0.0
    %273 = vmatprep.subr.mxu0 0.0
    %274 = vmatpush1.msra.mxu0 0.0
    %275 = vmatprep.subr.mxu0 0.0
    %276 = vmatpush1.msra.mxu0 0.0
    %277 = vmatprep.subr.mxu0 0.0
    %278 = vmatpush1.msra.mxu0 0.0
    %279 = vmatprep.subr.mxu0 0.0
    %280 = vmatpush1.msra.mxu0 0.0
    %281 = vmatprep.subr.mxu0 0.0
    %282 = vmatpush1.msra.mxu0 0.0
    %283 = vmatprep.subr.mxu0 0.0
    %284 = vmatpush1.msra.mxu0 0.0
    %285 = vmatprep.subr.mxu0 0.0
    %286 = vmatpush1.msra.mxu0 0.0
    %287 = vmatprep.subr.mxu0 0.0
    %288 = vmatpush1.msra.mxu0 0.0
    %289 = vmatprep.mubr.f32.mxu0 0.0
    %290 = vmatmul.mubr.f32.gmra.mrb[0].mxu0 %v32
    %v291 = vpop.f32.mrb[0].mxu0
    %v292 = vadd.f32 %v212, %v291
    %v293 = vpop.f32.mrb[0].mxu0
    %294 = vmatprep.mubr.f32.mxu0 0.0
    %295 = vmatmul.mubr.f32.gmra.mrb[0].mxu0 %v35
    %v296 = vpop.f32.mrb[0].mxu0
    %v297 = vadd.f32 %v212, %v296
    %v298 = vpop.f32.mrb[0].mxu0
    %299 = vdwg.mxu0
    %v300 = vlaneseq
    %v301 = vshrl.u32 %v300, 7
    %v302 = vadd.s32 %v301, 8
    %v303 = vcvt.s32.f32 %v301
    %v304 = vcvt.s32.f32 %v302
    %v305 = vlaneseq
    %v306 = vand.u32 %v305, 127
    %v307 = vcvt.s32.f32 %v306
    %v308 = vadd.f32 %v303, 0.5
    %v309 = vadd.f32 %v304, 0.5
    %v310 = vmul.f32 %v308, 0.125
    %v311 = vmul.f32 %v309, 0.125
    %v312 = vfloor.f32 %v310
    %v313 = vfloor.f32 %v311
    %v314 = vadd.f32 %v307, 0.5
    %v315 = vmul.f32 %v314, 0.125
    %v316 = vfloor.f32 %v315
    %vm317 = vcmp.eq.f32.partialorder %v312, %v316
    %vm318 = vcmp.eq.f32.partialorder %v313, %v316
    %v319 = vsel %vm317, 0.0, -1e+30
    %v320 = vsel %vm318, 0.0, -1e+30
    %vm321 = vcmask 64512
    %v323 = vsel %vm321, %v112, 0
    %v326 = vsel %vm321, %v113, 0
    %v329 = vsel %vm321, %v201, 0
    %v332 = vsel %vm321, %v206, 0
    %334 = vmatprep.subr.mxu0 0.0
    %335 = vmatpush1.xpose.msra.mxu0 %v329
    %336 = vmatprep.subr.mxu0 0.0
    %337 = vmatpush1.xpose.msra.mxu0 %v332
    %338 = vmatprep.subr.mxu0 0.0
    %339 = vmatpush1.xpose.msra.mxu0 0.0
    %340 = vmatprep.subr.mxu0 0.0
    %341 = vmatpush1.xpose.msra.mxu0 0.0
    %342 = vmatprep.subr.mxu0 0.0
    %343 = vmatpush1.xpose.msra.mxu0 0.0
    %344 = vmatprep.subr.mxu0 0.0
    %345 = vmatpush1.xpose.msra.mxu0 0.0
    %346 = vmatprep.subr.mxu0 0.0
    %347 = vmatpush1.xpose.msra.mxu0 0.0
    %348 = vmatprep.subr.mxu0 0.0
    %349 = vmatpush1.xpose.msra.mxu0 0.0
    %350 = vmatprep.subr.mxu0 0.0
    %351 = vmatpush1.xpose.msra.mxu0 0.0
    %352 = vmatprep.subr.mxu0 0.0
    %353 = vmatpush1.xpose.msra.mxu0 0.0
    %354 = vmatprep.subr.mxu0 0.0
    %355 = vmatpush1.xpose.msra.mxu0 0.0
    %356 = vmatprep.subr.mxu0 0.0
    %357 = vmatpush1.xpose.msra.mxu0 0.0
    %358 = vmatprep.subr.mxu0 0.0
    %359 = vmatpush1.xpose.msra.mxu0 0.0
    %360 = vmatprep.subr.mxu0 0.0
    %361 = vmatpush1.xpose.msra.mxu0 0.0
    %362 = vmatprep.subr.mxu0 0.0
    %363 = vmatpush1.xpose.msra.mxu0 0.0
    %364 = vmatprep.subr.mxu0 0.0
    %365 = vmatpush1.xpose.msra.mxu0 0.0
    %366 = vmatprep.subr.mxu0 0.0
    %367 = vmatpush1.xpose.msra.mxu0 0.0
    %368 = vmatprep.subr.mxu0 0.0
    %369 = vmatpush1.xpose.msra.mxu0 0.0
    %370 = vmatprep.subr.mxu0 0.0
    %371 = vmatpush1.xpose.msra.mxu0 0.0
    %372 = vmatprep.subr.mxu0 0.0
    %373 = vmatpush1.xpose.msra.mxu0 0.0
    %374 = vmatprep.subr.mxu0 0.0
    %375 = vmatpush1.xpose.msra.mxu0 0.0
    %376 = vmatprep.subr.mxu0 0.0
    %377 = vmatpush1.xpose.msra.mxu0 0.0
    %378 = vmatprep.subr.mxu0 0.0
    %379 = vmatpush1.xpose.msra.mxu0 0.0
    %380 = vmatprep.subr.mxu0 0.0
    %381 = vmatpush1.xpose.msra.mxu0 0.0
    %382 = vmatprep.subr.mxu0 0.0
    %383 = vmatpush1.xpose.msra.mxu0 0.0
    %384 = vmatprep.subr.mxu0 0.0
    %385 = vmatpush1.xpose.msra.mxu0 0.0
    %386 = vmatprep.subr.mxu0 0.0
    %387 = vmatpush1.xpose.msra.mxu0 0.0
    %388 = vmatprep.subr.mxu0 0.0
    %389 = vmatpush1.xpose.msra.mxu0 0.0
    %390 = vmatprep.subr.mxu0 0.0
    %391 = vmatpush1.xpose.msra.mxu0 0.0
    %392 = vmatprep.subr.mxu0 0.0
    %393 = vmatpush1.xpose.msra.mxu0 0.0
    %394 = vmatprep.subr.mxu0 0.0
    %395 = vmatpush1.xpose.msra.mxu0 0.0
    %396 = vmatprep.subr.mxu0 0.0
    %397 = vmatpush1.xpose.msra.mxu0 0.0
    %398 = vmatprep.mubr.f32.mxu0 0.0
    %399 = vmatmul.mubr.f32.gmra.mrb[0].mxu0 %v323
    %v400 = vpop.f32.mrb[0].mxu0
    %v401 = vadd.f32 %v319, %v400
    %v402 = vpop.f32.mrb[0].mxu0
    %403 = vmatprep.mubr.f32.mxu0 0.0
    %404 = vmatmul.mubr.f32.gmra.mrb[0].mxu0 %v326
    %v405 = vpop.f32.mrb[0].mxu0
    %v406 = vadd.f32 %v320, %v405
    %v407 = vpop.f32.mrb[0].mxu0
    %408 = vdwg.mxu0
    %vm409 = vcmask 130048
    %v410 = vsel %vm409, %v401, -inf
    %411 = vmax.xlane.f32.xlu0 %v410
    %v412 = vpop.xlane.xlu0 %411
    %v413 = vsel %vm409, %v406, -inf
    %414 = vmax.xlane.f32.xlu0 %v413
    %v415 = vpop.xlane.xlu0 %414
    %v416 = vsub.f32 %v401, %v412
    %v417 = vsub.f32 %v406, %v415
    %v418 = vmul.f32 %v416, 1.442695
    %v419 = vpow.pop %v418
    %v420 = vmul.f32 %v417, 1.442695
    %v421 = vpow.pop %v420
    %v422 = vsel %vm409, %v419, 0.0
    %423 = vadd.xlane.f32.xlu0 %v422
    %v424 = vpop.xlane.xlu0 %423
    %v425 = vsel %vm409, %v421, 0.0
    %426 = vadd.xlane.f32.xlu0 %v425
    %v427 = vpop.xlane.xlu0 %426
    %v428 = vrcp.pop %v424
    %v429 = vmul.f32 %v419, %v428
    %v430 = vrcp.pop %v427
    %v431 = vmul.f32 %v421, %v430
    %v433 = vsel %vm409, %v429, 0
    %v436 = vsel %vm409, %v431, 0
    %438 = vmatprep.subr.mxu0 0.0
    %439 = vmatpush1.msra.mxu0 %v292
    %440 = vmatprep.subr.mxu0 0.0
    %441 = vmatpush1.msra.mxu0 %v297
    %442 = vmatprep.subr.mxu0 0.0
    %443 = vmatpush1.msra.mxu0 0.0
    %444 = vmatprep.subr.mxu0 0.0
    %445 = vmatpush1.msra.mxu0 0.0
    %446 = vmatprep.subr.mxu0 0.0
    %447 = vmatpush1.msra.mxu0 0.0
    %448 = vmatprep.subr.mxu0 0.0
    %449 = vmatpush1.msra.mxu0 0.0
    %450 = vmatprep.subr.mxu0 0.0
    %451 = vmatpush1.msra.mxu0 0.0
    %452 = vmatprep.subr.mxu0 0.0
    %453 = vmatpush1.msra.mxu0 0.0
    %454 = vmatprep.subr.mxu0 0.0
    %455 = vmatpush1.msra.mxu0 0.0
    %456 = vmatprep.subr.mxu0 0.0
    %457 = vmatpush1.msra.mxu0 0.0
    %458 = vmatprep.subr.mxu0 0.0
    %459 = vmatpush1.msra.mxu0 0.0
    %460 = vmatprep.subr.mxu0 0.0
    %461 = vmatpush1.msra.mxu0 0.0
    %462 = vmatprep.subr.mxu0 0.0
    %463 = vmatpush1.msra.mxu0 0.0
    %464 = vmatprep.subr.mxu0 0.0
    %465 = vmatpush1.msra.mxu0 0.0
    %466 = vmatprep.subr.mxu0 0.0
    %467 = vmatpush1.msra.mxu0 0.0
    %468 = vmatprep.subr.mxu0 0.0
    %469 = vmatpush1.msra.mxu0 0.0
    %470 = vmatprep.subr.mxu0 0.0
    %471 = vmatpush1.msra.mxu0 0.0
    %472 = vmatprep.subr.mxu0 0.0
    %473 = vmatpush1.msra.mxu0 0.0
    %474 = vmatprep.subr.mxu0 0.0
    %475 = vmatpush1.msra.mxu0 0.0
    %476 = vmatprep.subr.mxu0 0.0
    %477 = vmatpush1.msra.mxu0 0.0
    %478 = vmatprep.subr.mxu0 0.0
    %479 = vmatpush1.msra.mxu0 0.0
    %480 = vmatprep.subr.mxu0 0.0
    %481 = vmatpush1.msra.mxu0 0.0
    %482 = vmatprep.subr.mxu0 0.0
    %483 = vmatpush1.msra.mxu0 0.0
    %484 = vmatprep.subr.mxu0 0.0
    %485 = vmatpush1.msra.mxu0 0.0
    %486 = vmatprep.subr.mxu0 0.0
    %487 = vmatpush1.msra.mxu0 0.0
    %488 = vmatprep.subr.mxu0 0.0
    %489 = vmatpush1.msra.mxu0 0.0
    %490 = vmatprep.subr.mxu0 0.0
    %491 = vmatpush1.msra.mxu0 0.0
    %492 = vmatprep.subr.mxu0 0.0
    %493 = vmatpush1.msra.mxu0 0.0
    %494 = vmatprep.subr.mxu0 0.0
    %495 = vmatpush1.msra.mxu0 0.0
    %496 = vmatprep.subr.mxu0 0.0
    %497 = vmatpush1.msra.mxu0 0.0
    %498 = vmatprep.subr.mxu0 0.0
    %499 = vmatpush1.msra.mxu0 0.0
    %500 = vmatprep.subr.mxu0 0.0
    %501 = vmatpush1.msra.mxu0 0.0
    %502 = vmatprep.mubr.f32.mxu0 0.0
    %503 = vmatmul.mubr.f32.gmra.mrb[0].mxu0 %v433
    %v504 = vpop.f32.mrb[0].mxu0
    %v505 = vadd.f32 0.0, %v504
    %v506 = vpop.f32.mrb[0].mxu0
    %507 = vmatprep.mubr.f32.mxu0 0.0
    %508 = vmatmul.mubr.f32.gmra.mrb[0].mxu0 %v436
    %v509 = vpop.f32.mrb[0].mxu0
    %v510 = vadd.f32 0.0, %v509
    %v511 = vpop.f32.mrb[0].mxu0
    %512 = vdwg.mxu0
    %v513 = vld [vmem:[%s1] sm:$0xff]
    %514 = vrot.lane.b32.xlu0 %v112, 120
    %v515 = vpop.permute.xlu0 %514
    %516 = vrot.lane.b32.xlu0 %v113, 120
    %v517 = vpop.permute.xlu0 %516
    %518 = vrot.lane.b32.xlu0 %v201, 120
    %v519 = vpop.permute.xlu0 %518
    %520 = vrot.lane.b32.xlu0 %v206, 120
    %v521 = vpop.permute.xlu0 %520
    %v522 = vsel %vm321, %v515, 0
    %v524 = vsel %vm321, %v517, 0
    %v526 = vsel %vm321, %v519, 0
    %v528 = vsel %vm321, %v521, 0
    %530 = vmatprep.subr.mxu0 0.0
    %531 = vmatpush1.xpose.msra.mxu0 %v526
    %532 = vmatprep.subr.mxu0 0.0
    %533 = vmatpush1.xpose.msra.mxu0 %v528
    %534 = vmatprep.subr.mxu0 0.0
    %535 = vmatpush1.xpose.msra.mxu0 0.0
    %536 = vmatprep.subr.mxu0 0.0
    %537 = vmatpush1.xpose.msra.mxu0 0.0
    %538 = vmatprep.subr.mxu0 0.0
    %539 = vmatpush1.xpose.msra.mxu0 0.0
    %540 = vmatprep.subr.mxu0 0.0
    %541 = vmatpush1.xpose.msra.mxu0 0.0
    %542 = vmatprep.subr.mxu0 0.0
    %543 = vmatpush1.xpose.msra.mxu0 0.0
    %544 = vmatprep.subr.mxu0 0.0
    %545 = vmatpush1.xpose.msra.mxu0 0.0
    %546 = vmatprep.subr.mxu0 0.0
    %547 = vmatpush1.xpose.msra.mxu0 0.0
    %548 = vmatprep.subr.mxu0 0.0
    %549 = vmatpush1.xpose.msra.mxu0 0.0
    %550 = vmatprep.subr.mxu0 0.0
    %551 = vmatpush1.xpose.msra.mxu0 0.0
    %552 = vmatprep.subr.mxu0 0.0
    %553 = vmatpush1.xpose.msra.mxu0 0.0
    %554 = vmatprep.subr.mxu0 0.0
    %555 = vmatpush1.xpose.msra.mxu0 0.0
    %556 = vmatprep.subr.mxu0 0.0
    %557 = vmatpush1.xpose.msra.mxu0 0.0
    %558 = vmatprep.subr.mxu0 0.0
    %559 = vmatpush1.xpose.msra.mxu0 0.0
    %560 = vmatprep.subr.mxu0 0.0
    %561 = vmatpush1.xpose.msra.mxu0 0.0
    %562 = vmatprep.subr.mxu0 0.0
    %563 = vmatpush1.xpose.msra.mxu0 0.0
    %564 = vmatprep.subr.mxu0 0.0
    %565 = vmatpush1.xpose.msra.mxu0 0.0
    %566 = vmatprep.subr.mxu0 0.0
    %567 = vmatpush1.xpose.msra.mxu0 0.0
    %568 = vmatprep.subr.mxu0 0.0
    %569 = vmatpush1.xpose.msra.mxu0 0.0
    %570 = vmatprep.subr.mxu0 0.0
    %571 = vmatpush1.xpose.msra.mxu0 0.0
    %572 = vmatprep.subr.mxu0 0.0
    %573 = vmatpush1.xpose.msra.mxu0 0.0
    %574 = vmatprep.subr.mxu0 0.0
    %575 = vmatpush1.xpose.msra.mxu0 0.0
    %576 = vmatprep.subr.mxu0 0.0
    %577 = vmatpush1.xpose.msra.mxu0 0.0
    %578 = vmatprep.subr.mxu0 0.0
    %579 = vmatpush1.xpose.msra.mxu0 0.0
    %580 = vmatprep.subr.mxu0 0.0
    %581 = vmatpush1.xpose.msra.mxu0 0.0
    %582 = vmatprep.subr.mxu0 0.0
    %583 = vmatpush1.xpose.msra.mxu0 0.0
    %584 = vmatprep.subr.mxu0 0.0
    %585 = vmatpush1.xpose.msra.mxu0 0.0
    %586 = vmatprep.subr.mxu0 0.0
    %587 = vmatpush1.xpose.msra.mxu0 0.0
    %588 = vmatprep.subr.mxu0 0.0
    %589 = vmatpush1.xpose.msra.mxu0 0.0
    %590 = vmatprep.subr.mxu0 0.0
    %591 = vmatpush1.xpose.msra.mxu0 0.0
    %592 = vmatprep.subr.mxu0 0.0
    %593 = vmatpush1.xpose.msra.mxu0 0.0
    %594 = vmatprep.mubr.f32.mxu0 0.0
    %595 = vmatmul.mubr.f32.gmra.mrb[0].mxu0 %v522
    %v596 = vpop.f32.mrb[0].mxu0
    %v597 = vadd.f32 %v319, %v596
    %v598 = vpop.f32.mrb[0].mxu0
    %599 = vmatprep.mubr.f32.mxu0 0.0
    %600 = vmatmul.mubr.f32.gmra.mrb[0].mxu0 %v524
    %v601 = vpop.f32.mrb[0].mxu0
    %v602 = vadd.f32 %v320, %v601
    %v603 = vpop.f32.mrb[0].mxu0
    %604 = vdwg.mxu0
    %v605 = vsel %vm409, %v597, -inf
    %606 = vmax.xlane.f32.xlu0 %v605
    %v607 = vpop.xlane.xlu0 %606
    %v608 = vsel %vm409, %v602, -inf
    %609 = vmax.xlane.f32.xlu0 %v608
    %v610 = vpop.xlane.xlu0 %609
    %v611 = vsub.f32 %v597, %v607
    %v612 = vsub.f32 %v602, %v610
    %v613 = vmul.f32 %v611, 1.442695
    %v614 = vpow.pop %v613
    %v615 = vmul.f32 %v612, 1.442695
    %v616 = vpow.pop %v615
    %v617 = vsel %vm409, %v614, 0.0
    %618 = vadd.xlane.f32.xlu0 %v617
    %v619 = vpop.xlane.xlu0 %618
    %v620 = vsel %vm409, %v616, 0.0
    %621 = vadd.xlane.f32.xlu0 %v620
    %v622 = vpop.xlane.xlu0 %621
    %v623 = vrcp.pop %v619
    %v624 = vmul.f32 %v614, %v623
    %v625 = vrcp.pop %v622
    %v626 = vmul.f32 %v616, %v625
    %629 = vrot.lane.b32.xlu0 %v292, 120
    %v630 = vpop.permute.xlu0 %629
    %631 = vrot.lane.b32.xlu0 %v297, 120
    %v632 = vpop.permute.xlu0 %631
    %v636 = vsel %vm409, %v624, 0
    %v639 = vsel %vm409, %v626, 0
    %641 = vmatprep.subr.mxu0 0.0
    %642 = vmatpush1.msra.mxu0 %v630
    %643 = vmatprep.subr.mxu0 0.0
    %644 = vmatpush1.msra.mxu0 %v632
    %645 = vmatprep.subr.mxu0 0.0
    %646 = vmatpush1.msra.mxu0 0.0
    %647 = vmatprep.subr.mxu0 0.0
    %648 = vmatpush1.msra.mxu0 0.0
    %649 = vmatprep.subr.mxu0 0.0
    %650 = vmatpush1.msra.mxu0 0.0
    %651 = vmatprep.subr.mxu0 0.0
    %652 = vmatpush1.msra.mxu0 0.0
    %653 = vmatprep.subr.mxu0 0.0
    %654 = vmatpush1.msra.mxu0 0.0
    %655 = vmatprep.subr.mxu0 0.0
    %656 = vmatpush1.msra.mxu0 0.0
    %657 = vmatprep.subr.mxu0 0.0
    %658 = vmatpush1.msra.mxu0 0.0
    %659 = vmatprep.subr.mxu0 0.0
    %660 = vmatpush1.msra.mxu0 0.0
    %661 = vmatprep.subr.mxu0 0.0
    %662 = vmatpush1.msra.mxu0 0.0
    %663 = vmatprep.subr.mxu0 0.0
    %664 = vmatpush1.msra.mxu0 0.0
    %665 = vmatprep.subr.mxu0 0.0
    %666 = vmatpush1.msra.mxu0 0.0
    %667 = vmatprep.subr.mxu0 0.0
    %668 = vmatpush1.msra.mxu0 0.0
    %669 = vmatprep.subr.mxu0 0.0
    %670 = vmatpush1.msra.mxu0 0.0
    %671 = vmatprep.subr.mxu0 0.0
    %672 = vmatpush1.msra.mxu0 0.0
    %673 = vmatprep.subr.mxu0 0.0
    %674 = vmatpush1.msra.mxu0 0.0
    %675 = vmatprep.subr.mxu0 0.0
    %676 = vmatpush1.msra.mxu0 0.0
    %677 = vmatprep.subr.mxu0 0.0
    %678 = vmatpush1.msra.mxu0 0.0
    %679 = vmatprep.subr.mxu0 0.0
    %680 = vmatpush1.msra.mxu0 0.0
    %681 = vmatprep.subr.mxu0 0.0
    %682 = vmatpush1.msra.mxu0 0.0
    %683 = vmatprep.subr.mxu0 0.0
    %684 = vmatpush1.msra.mxu0 0.0
    %685 = vmatprep.subr.mxu0 0.0
    %686 = vmatpush1.msra.mxu0 0.0
    %687 = vmatprep.subr.mxu0 0.0
    %688 = vmatpush1.msra.mxu0 0.0
    %689 = vmatprep.subr.mxu0 0.0
    %690 = vmatpush1.msra.mxu0 0.0
    %691 = vmatprep.subr.mxu0 0.0
    %692 = vmatpush1.msra.mxu0 0.0
    %693 = vmatprep.subr.mxu0 0.0
    %694 = vmatpush1.msra.mxu0 0.0
    %695 = vmatprep.subr.mxu0 0.0
    %696 = vmatpush1.msra.mxu0 0.0
    %697 = vmatprep.subr.mxu0 0.0
    %698 = vmatpush1.msra.mxu0 0.0
    %699 = vmatprep.subr.mxu0 0.0
    %700 = vmatpush1.msra.mxu0 0.0
    %701 = vmatprep.subr.mxu0 0.0
    %702 = vmatpush1.msra.mxu0 0.0
    %703 = vmatprep.subr.mxu0 0.0
    %704 = vmatpush1.msra.mxu0 0.0
    %705 = vmatprep.mubr.f32.mxu0 0.0
    %706 = vmatmul.mubr.f32.gmra.mrb[0].mxu0 %v636
    %v707 = vpop.f32.mrb[0].mxu0
    %v708 = vadd.f32 0.0, %v707
    %v709 = vpop.f32.mrb[0].mxu0
    %710 = vmatprep.mubr.f32.mxu0 0.0
    %711 = vmatmul.mubr.f32.gmra.mrb[0].mxu0 %v639
    %v712 = vpop.f32.mrb[0].mxu0
    %v713 = vadd.f32 0.0, %v712
    %v714 = vpop.f32.mrb[0].mxu0
    %715 = vdwg.mxu0
    %v716 = vld [vmem:[%s1 + $0x10] sm:$0xff]
    %718 = vrot.lane.b32.xlu0 %v716, 32
    %v719 = vpop.permute.xlu0 %718
    %v722 = vsel %vm321, %v708, 0
    %v725 = vsel %vm321, %v713, 0
    %727 = vmatprep.subr.mxu0 0.0
    %728 = vmatpush1.msra.mxu0 %v719
    %729 = vmatprep.subr.mxu0 0.0
    %730 = vmatpush1.msra.mxu0 0.0
    %731 = vmatprep.subr.mxu0 0.0
    %732 = vmatpush1.msra.mxu0 0.0
    %733 = vmatprep.subr.mxu0 0.0
    %734 = vmatpush1.msra.mxu0 0.0
    %735 = vmatprep.subr.mxu0 0.0
    %736 = vmatpush1.msra.mxu0 0.0
    %737 = vmatprep.subr.mxu0 0.0
    %738 = vmatpush1.msra.mxu0 0.0
    %739 = vmatprep.subr.mxu0 0.0
    %740 = vmatpush1.msra.mxu0 0.0
    %741 = vmatprep.subr.mxu0 0.0
    %742 = vmatpush1.msra.mxu0 0.0
    %743 = vmatprep.subr.mxu0 0.0
    %744 = vmatpush1.msra.mxu0 0.0
    %745 = vmatprep.subr.mxu0 0.0
    %746 = vmatpush1.msra.mxu0 0.0
    %747 = vmatprep.subr.mxu0 0.0
    %748 = vmatpush1.msra.mxu0 0.0
    %749 = vmatprep.subr.mxu0 0.0
    %750 = vmatpush1.msra.mxu0 0.0
    %751 = vmatprep.subr.mxu0 0.0
    %752 = vmatpush1.msra.mxu0 0.0
    %753 = vmatprep.subr.mxu0 0.0
    %754 = vmatpush1.msra.mxu0 0.0
    %755 = vmatprep.subr.mxu0 0.0
    %756 = vmatpush1.msra.mxu0 0.0
    %757 = vmatprep.subr.mxu0 0.0
    %758 = vmatpush1.msra.mxu0 0.0
    %759 = vmatprep.subr.mxu0 0.0
    %760 = vmatpush1.msra.mxu0 0.0
    %761 = vmatprep.subr.mxu0 0.0
    %762 = vmatpush1.msra.mxu0 0.0
    %763 = vmatprep.subr.mxu0 0.0
    %764 = vmatpush1.msra.mxu0 0.0
    %765 = vmatprep.subr.mxu0 0.0
    %766 = vmatpush1.msra.mxu0 0.0
    %767 = vmatprep.subr.mxu0 0.0
    %768 = vmatpush1.msra.mxu0 0.0
    %769 = vmatprep.subr.mxu0 0.0
    %770 = vmatpush1.msra.mxu0 0.0
    %771 = vmatprep.subr.mxu0 0.0
    %772 = vmatpush1.msra.mxu0 0.0
    %773 = vmatprep.subr.mxu0 0.0
    %774 = vmatpush1.msra.mxu0 0.0
    %775 = vmatprep.subr.mxu0 0.0
    %776 = vmatpush1.msra.mxu0 0.0
    %777 = vmatprep.subr.mxu0 0.0
    %778 = vmatpush1.msra.mxu0 0.0
    %779 = vmatprep.subr.mxu0 0.0
    %780 = vmatpush1.msra.mxu0 0.0
    %781 = vmatprep.subr.mxu0 0.0
    %782 = vmatpush1.msra.mxu0 0.0
    %783 = vmatprep.subr.mxu0 0.0
    %784 = vmatpush1.msra.mxu0 0.0
    %785 = vmatprep.subr.mxu0 0.0
    %786 = vmatpush1.msra.mxu0 0.0
    %787 = vmatprep.subr.mxu0 0.0
    %788 = vmatpush1.msra.mxu0 0.0
    %789 = vmatprep.subr.mxu0 0.0
    %790 = vmatpush1.msra.mxu0 0.0
    %791 = vmatprep.mubr.f32.mxu0 0.0
    %792 = vmatmul.mubr.f32.gmra.mrb[0].mxu0 %v722
    %v793 = vpop.f32.mrb[0].mxu0
    %v794 = vadd.f32 0.0, %v793
    %v795 = vpop.f32.mrb[0].mxu0
    %796 = vmatprep.mubr.f32.mxu0 0.0
    %797 = vmatmul.mubr.f32.gmra.mrb[0].mxu0 %v725
    %v798 = vpop.f32.mrb[0].mxu0
    %v799 = vadd.f32 0.0, %v798
    %v800 = vpop.f32.mrb[0].mxu0
    %801 = vdwg.mxu0
    %803 = vrot.lane.b32.xlu0 %v513, 32
    %v804 = vpop.permute.xlu0 %803
    %v807 = vsel %vm321, %v505, 0
    %v810 = vsel %vm321, %v510, 0
    %812 = vmatprep.subr.mxu0 0.0
    %813 = vmatpush1.msra.mxu0 %v804
    %814 = vmatprep.subr.mxu0 0.0
    %815 = vmatpush1.msra.mxu0 0.0
    %816 = vmatprep.subr.mxu0 0.0
    %817 = vmatpush1.msra.mxu0 0.0
    %818 = vmatprep.subr.mxu0 0.0
    %819 = vmatpush1.msra.mxu0 0.0
    %820 = vmatprep.subr.mxu0 0.0
    %821 = vmatpush1.msra.mxu0 0.0
    %822 = vmatprep.subr.mxu0 0.0
    %823 = vmatpush1.msra.mxu0 0.0
    %824 = vmatprep.subr.mxu0 0.0
    %825 = vmatpush1.msra.mxu0 0.0
    %826 = vmatprep.subr.mxu0 0.0
    %827 = vmatpush1.msra.mxu0 0.0
    %828 = vmatprep.subr.mxu0 0.0
    %829 = vmatpush1.msra.mxu0 0.0
    %830 = vmatprep.subr.mxu0 0.0
    %831 = vmatpush1.msra.mxu0 0.0
    %832 = vmatprep.subr.mxu0 0.0
    %833 = vmatpush1.msra.mxu0 0.0
    %834 = vmatprep.subr.mxu0 0.0
    %835 = vmatpush1.msra.mxu0 0.0
    %836 = vmatprep.subr.mxu0 0.0
    %837 = vmatpush1.msra.mxu0 0.0
    %838 = vmatprep.subr.mxu0 0.0
    %839 = vmatpush1.msra.mxu0 0.0
    %840 = vmatprep.subr.mxu0 0.0
    %841 = vmatpush1.msra.mxu0 0.0
    %842 = vmatprep.subr.mxu0 0.0
    %843 = vmatpush1.msra.mxu0 0.0
    %844 = vmatprep.subr.mxu0 0.0
    %845 = vmatpush1.msra.mxu0 0.0
    %846 = vmatprep.subr.mxu0 0.0
    %847 = vmatpush1.msra.mxu0 0.0
    %848 = vmatprep.subr.mxu0 0.0
    %849 = vmatpush1.msra.mxu0 0.0
    %850 = vmatprep.subr.mxu0 0.0
    %851 = vmatpush1.msra.mxu0 0.0
    %852 = vmatprep.subr.mxu0 0.0
    %853 = vmatpush1.msra.mxu0 0.0
    %854 = vmatprep.subr.mxu0 0.0
    %855 = vmatpush1.msra.mxu0 0.0
    %856 = vmatprep.subr.mxu0 0.0
    %857 = vmatpush1.msra.mxu0 0.0
    %858 = vmatprep.subr.mxu0 0.0
    %859 = vmatpush1.msra.mxu0 0.0
    %860 = vmatprep.subr.mxu0 0.0
    %861 = vmatpush1.msra.mxu0 0.0
    %862 = vmatprep.subr.mxu0 0.0
    %863 = vmatpush1.msra.mxu0 0.0
    %864 = vmatprep.subr.mxu0 0.0
    %865 = vmatpush1.msra.mxu0 0.0
    %866 = vmatprep.subr.mxu0 0.0
    %867 = vmatpush1.msra.mxu0 0.0
    %868 = vmatprep.subr.mxu0 0.0
    %869 = vmatpush1.msra.mxu0 0.0
    %870 = vmatprep.subr.mxu0 0.0
    %871 = vmatpush1.msra.mxu0 0.0
    %872 = vmatprep.subr.mxu0 0.0
    %873 = vmatpush1.msra.mxu0 0.0
    %874 = vmatprep.subr.mxu0 0.0
    %875 = vmatpush1.msra.mxu0 0.0
    %876 = vmatprep.mubr.f32.mxu0 0.0
    %877 = vmatmul.mubr.f32.gmra.mrb[0].mxu0 %v807
    %v878 = vpop.f32.mrb[0].mxu0
    %v879 = vadd.f32 %v794, %v878
    %v880 = vpop.f32.mrb[0].mxu0
    %881 = vmatprep.mubr.f32.mxu0 0.0
    %882 = vmatmul.mubr.f32.gmra.mrb[0].mxu0 %v810
    %v883 = vpop.f32.mrb[0].mxu0
    %v884 = vadd.f32 %v799, %v883
    %v885 = vpop.f32.mrb[0].mxu0
    %886 = vdwg.mxu0
    %887 = vrot.lane.b32.xlu0 %v112, 112
    %v888 = vpop.permute.xlu0 %887
    %889 = vrot.lane.b32.xlu0 %v113, 112
    %v890 = vpop.permute.xlu0 %889
    %891 = vrot.lane.b32.xlu0 %v201, 112
    %v892 = vpop.permute.xlu0 %891
    %893 = vrot.lane.b32.xlu0 %v206, 112
    %v894 = vpop.permute.xlu0 %893
    %v895 = vsel %vm321, %v888, 0
    %v897 = vsel %vm321, %v890, 0
    %v899 = vsel %vm321, %v892, 0
    %v901 = vsel %vm321, %v894, 0
    %903 = vmatprep.subr.mxu0 0.0
    %904 = vmatpush1.xpose.msra.mxu0 %v899
    %905 = vmatprep.subr.mxu0 0.0
    %906 = vmatpush1.xpose.msra.mxu0 %v901
    %907 = vmatprep.subr.mxu0 0.0
    %908 = vmatpush1.xpose.msra.mxu0 0.0
    %909 = vmatprep.subr.mxu0 0.0
    %910 = vmatpush1.xpose.msra.mxu0 0.0
    %911 = vmatprep.subr.mxu0 0.0
    %912 = vmatpush1.xpose.msra.mxu0 0.0
    %913 = vmatprep.subr.mxu0 0.0
    %914 = vmatpush1.xpose.msra.mxu0 0.0
    %915 = vmatprep.subr.mxu0 0.0
    %916 = vmatpush1.xpose.msra.mxu0 0.0
    %917 = vmatprep.subr.mxu0 0.0
    %918 = vmatpush1.xpose.msra.mxu0 0.0
    %919 = vmatprep.subr.mxu0 0.0
    %920 = vmatpush1.xpose.msra.mxu0 0.0
    %921 = vmatprep.subr.mxu0 0.0
    %922 = vmatpush1.xpose.msra.mxu0 0.0
    %923 = vmatprep.subr.mxu0 0.0
    %924 = vmatpush1.xpose.msra.mxu0 0.0
    %925 = vmatprep.subr.mxu0 0.0
    %926 = vmatpush1.xpose.msra.mxu0 0.0
    %927 = vmatprep.subr.mxu0 0.0
    %928 = vmatpush1.xpose.msra.mxu0 0.0
    %929 = vmatprep.subr.mxu0 0.0
    %930 = vmatpush1.xpose.msra.mxu0 0.0
    %931 = vmatprep.subr.mxu0 0.0
    %932 = vmatpush1.xpose.msra.mxu0 0.0
    %933 = vmatprep.subr.mxu0 0.0
    %934 = vmatpush1.xpose.msra.mxu0 0.0
    %935 = vmatprep.subr.mxu0 0.0
    %936 = vmatpush1.xpose.msra.mxu0 0.0
    %937 = vmatprep.subr.mxu0 0.0
    %938 = vmatpush1.xpose.msra.mxu0 0.0
    %939 = vmatprep.subr.mxu0 0.0
    %940 = vmatpush1.xpose.msra.mxu0 0.0
    %941 = vmatprep.subr.mxu0 0.0
    %942 = vmatpush1.xpose.msra.mxu0 0.0
    %943 = vmatprep.subr.mxu0 0.0
    %944 = vmatpush1.xpose.msra.mxu0 0.0
    %945 = vmatprep.subr.mxu0 0.0
    %946 = vmatpush1.xpose.msra.mxu0 0.0
    %947 = vmatprep.subr.mxu0 0.0
    %948 = vmatpush1.xpose.msra.mxu0 0.0
    %949 = vmatprep.subr.mxu0 0.0
    %950 = vmatpush1.xpose.msra.mxu0 0.0
    %951 = vmatprep.subr.mxu0 0.0
    %952 = vmatpush1.xpose.msra.mxu0 0.0
    %953 = vmatprep.subr.mxu0 0.0
    %954 = vmatpush1.xpose.msra.mxu0 0.0
    %955 = vmatprep.subr.mxu0 0.0
    %956 = vmatpush1.xpose.msra.mxu0 0.0
    %957 = vmatprep.subr.mxu0 0.0
    %958 = vmatpush1.xpose.msra.mxu0 0.0
    %959 = vmatprep.subr.mxu0 0.0
    %960 = vmatpush1.xpose.msra.mxu0 0.0
    %961 = vmatprep.subr.mxu0 0.0
    %962 = vmatpush1.xpose.msra.mxu0 0.0
    %963 = vmatprep.subr.mxu0 0.0
    %964 = vmatpush1.xpose.msra.mxu0 0.0
    %965 = vmatprep.subr.mxu0 0.0
    %966 = vmatpush1.xpose.msra.mxu0 0.0
    %967 = vmatprep.mubr.f32.mxu0 0.0
    %968 = vmatmul.mubr.f32.gmra.mrb[0].mxu0 %v895
    %v969 = vpop.f32.mrb[0].mxu0
    %v970 = vadd.f32 %v319, %v969
    %v971 = vpop.f32.mrb[0].mxu0
    %972 = vmatprep.mubr.f32.mxu0 0.0
    %973 = vmatmul.mubr.f32.gmra.mrb[0].mxu0 %v897
    %v974 = vpop.f32.mrb[0].mxu0
    %v975 = vadd.f32 %v320, %v974
    %v976 = vpop.f32.mrb[0].mxu0
    %977 = vdwg.mxu0
    %v978 = vsel %vm409, %v970, -inf
    %979 = vmax.xlane.f32.xlu0 %v978
    %v980 = vpop.xlane.xlu0 %979
    %v981 = vsel %vm409, %v975, -inf
    %982 = vmax.xlane.f32.xlu0 %v981
    %v983 = vpop.xlane.xlu0 %982
    %v984 = vsub.f32 %v970, %v980
    %v985 = vsub.f32 %v975, %v983
    %v986 = vmul.f32 %v984, 1.442695
    %v987 = vpow.pop %v986
    %v988 = vmul.f32 %v985, 1.442695
    %v989 = vpow.pop %v988
    %v990 = vsel %vm409, %v987, 0.0
    %991 = vadd.xlane.f32.xlu0 %v990
    %v992 = vpop.xlane.xlu0 %991
    %v993 = vsel %vm409, %v989, 0.0
    %994 = vadd.xlane.f32.xlu0 %v993
    %v995 = vpop.xlane.xlu0 %994
    %v996 = vrcp.pop %v992
    %v997 = vmul.f32 %v987, %v996
    %v998 = vrcp.pop %v995
    %v999 = vmul.f32 %v989, %v998
    %1000 = vrot.lane.b32.xlu0 %v292, 112
    %v1001 = vpop.permute.xlu0 %1000
    %1002 = vrot.lane.b32.xlu0 %v297, 112
    %v1003 = vpop.permute.xlu0 %1002
    %v1007 = vsel %vm409, %v997, 0
    %v1010 = vsel %vm409, %v999, 0
    %1012 = vmatprep.subr.mxu0 0.0
    %1013 = vmatpush1.msra.mxu0 %v1001
    %1014 = vmatprep.subr.mxu0 0.0
    %1015 = vmatpush1.msra.mxu0 %v1003
    %1016 = vmatprep.subr.mxu0 0.0
    %1017 = vmatpush1.msra.mxu0 0.0
    %1018 = vmatprep.subr.mxu0 0.0
    %1019 = vmatpush1.msra.mxu0 0.0
    %1020 = vmatprep.subr.mxu0 0.0
    %1021 = vmatpush1.msra.mxu0 0.0
    %1022 = vmatprep.subr.mxu0 0.0
    %1023 = vmatpush1.msra.mxu0 0.0
    %1024 = vmatprep.subr.mxu0 0.0
    %1025 = vmatpush1.msra.mxu0 0.0
    %1026 = vmatprep.subr.mxu0 0.0
    %1027 = vmatpush1.msra.mxu0 0.0
    %1028 = vmatprep.subr.mxu0 0.0
    %1029 = vmatpush1.msra.mxu0 0.0
    %1030 = vmatprep.subr.mxu0 0.0
    %1031 = vmatpush1.msra.mxu0 0.0
    %1032 = vmatprep.subr.mxu0 0.0
    %1033 = vmatpush1.msra.mxu0 0.0
    %1034 = vmatprep.subr.mxu0 0.0
    %1035 = vmatpush1.msra.mxu0 0.0
    %1036 = vmatprep.subr.mxu0 0.0
    %1037 = vmatpush1.msra.mxu0 0.0
    %1038 = vmatprep.subr.mxu0 0.0
    %1039 = vmatpush1.msra.mxu0 0.0
    %1040 = vmatprep.subr.mxu0 0.0
    %1041 = vmatpush1.msra.mxu0 0.0
    %1042 = vmatprep.subr.mxu0 0.0
    %1043 = vmatpush1.msra.mxu0 0.0
    %1044 = vmatprep.subr.mxu0 0.0
    %1045 = vmatpush1.msra.mxu0 0.0
    %1046 = vmatprep.subr.mxu0 0.0
    %1047 = vmatpush1.msra.mxu0 0.0
    %1048 = vmatprep.subr.mxu0 0.0
    %1049 = vmatpush1.msra.mxu0 0.0
    %1050 = vmatprep.subr.mxu0 0.0
    %1051 = vmatpush1.msra.mxu0 0.0
    %1052 = vmatprep.subr.mxu0 0.0
    %1053 = vmatpush1.msra.mxu0 0.0
    %1054 = vmatprep.subr.mxu0 0.0
    %1055 = vmatpush1.msra.mxu0 0.0
    %1056 = vmatprep.subr.mxu0 0.0
    %1057 = vmatpush1.msra.mxu0 0.0
    %1058 = vmatprep.subr.mxu0 0.0
    %1059 = vmatpush1.msra.mxu0 0.0
    %1060 = vmatprep.subr.mxu0 0.0
    %1061 = vmatpush1.msra.mxu0 0.0
    %1062 = vmatprep.subr.mxu0 0.0
    %1063 = vmatpush1.msra.mxu0 0.0
    %1064 = vmatprep.subr.mxu0 0.0
    %1065 = vmatpush1.msra.mxu0 0.0
    %1066 = vmatprep.subr.mxu0 0.0
    %1067 = vmatpush1.msra.mxu0 0.0
    %1068 = vmatprep.subr.mxu0 0.0
    %1069 = vmatpush1.msra.mxu0 0.0
    %1070 = vmatprep.subr.mxu0 0.0
    %1071 = vmatpush1.msra.mxu0 0.0
    %1072 = vmatprep.subr.mxu0 0.0
    %1073 = vmatpush1.msra.mxu0 0.0
    %1074 = vmatprep.subr.mxu0 0.0
    %1075 = vmatpush1.msra.mxu0 0.0
    %1076 = vmatprep.mubr.f32.mxu0 0.0
    %1077 = vmatmul.mubr.f32.gmra.mrb[0].mxu0 %v1007
    %v1078 = vpop.f32.mrb[0].mxu0
    %v1079 = vadd.f32 0.0, %v1078
    %v1080 = vpop.f32.mrb[0].mxu0
    %1081 = vmatprep.mubr.f32.mxu0 0.0
    %1082 = vmatmul.mubr.f32.gmra.mrb[0].mxu0 %v1010
    %v1083 = vpop.f32.mrb[0].mxu0
    %v1084 = vadd.f32 0.0, %v1083
    %v1085 = vpop.f32.mrb[0].mxu0
    %1086 = vdwg.mxu0
    %v1087 = vld [vmem:[%s1 + $0x20] sm:$0xff]
    %1089 = vrot.lane.b32.xlu0 %v1087, 32
    %v1090 = vpop.permute.xlu0 %1089
    %v1093 = vsel %vm321, %v1079, 0
    %v1096 = vsel %vm321, %v1084, 0
    %1098 = vmatprep.subr.mxu0 0.0
    %1099 = vmatpush1.msra.mxu0 %v1090
    %1100 = vmatprep.subr.mxu0 0.0
    %1101 = vmatpush1.msra.mxu0 0.0
    %1102 = vmatprep.subr.mxu0 0.0
    %1103 = vmatpush1.msra.mxu0 0.0
    %1104 = vmatprep.subr.mxu0 0.0
    %1105 = vmatpush1.msra.mxu0 0.0
    %1106 = vmatprep.subr.mxu0 0.0
    %1107 = vmatpush1.msra.mxu0 0.0
    %1108 = vmatprep.subr.mxu0 0.0
    %1109 = vmatpush1.msra.mxu0 0.0
    %1110 = vmatprep.subr.mxu0 0.0
    %1111 = vmatpush1.msra.mxu0 0.0
    %1112 = vmatprep.subr.mxu0 0.0
    %1113 = vmatpush1.msra.mxu0 0.0
    %1114 = vmatprep.subr.mxu0 0.0
    %1115 = vmatpush1.msra.mxu0 0.0
    %1116 = vmatprep.subr.mxu0 0.0
    %1117 = vmatpush1.msra.mxu0 0.0
    %1118 = vmatprep.subr.mxu0 0.0
    %1119 = vmatpush1.msra.mxu0 0.0
    %1120 = vmatprep.subr.mxu0 0.0
    %1121 = vmatpush1.msra.mxu0 0.0
    %1122 = vmatprep.subr.mxu0 0.0
    %1123 = vmatpush1.msra.mxu0 0.0
    %1124 = vmatprep.subr.mxu0 0.0
    %1125 = vmatpush1.msra.mxu0 0.0
    %1126 = vmatprep.subr.mxu0 0.0
    %1127 = vmatpush1.msra.mxu0 0.0
    %1128 = vmatprep.subr.mxu0 0.0
    %1129 = vmatpush1.msra.mxu0 0.0
    %1130 = vmatprep.subr.mxu0 0.0
    %1131 = vmatpush1.msra.mxu0 0.0
    %1132 = vmatprep.subr.mxu0 0.0
    %1133 = vmatpush1.msra.mxu0 0.0
    %1134 = vmatprep.subr.mxu0 0.0
    %1135 = vmatpush1.msra.mxu0 0.0
    %1136 = vmatprep.subr.mxu0 0.0
    %1137 = vmatpush1.msra.mxu0 0.0
    %1138 = vmatprep.subr.mxu0 0.0
    %1139 = vmatpush1.msra.mxu0 0.0
    %1140 = vmatprep.subr.mxu0 0.0
    %1141 = vmatpush1.msra.mxu0 0.0
    %1142 = vmatprep.subr.mxu0 0.0
    %1143 = vmatpush1.msra.mxu0 0.0
    %1144 = vmatprep.subr.mxu0 0.0
    %1145 = vmatpush1.msra.mxu0 0.0
    %1146 = vmatprep.subr.mxu0 0.0
    %1147 = vmatpush1.msra.mxu0 0.0
    %1148 = vmatprep.subr.mxu0 0.0
    %1149 = vmatpush1.msra.mxu0 0.0
    %1150 = vmatprep.subr.mxu0 0.0
    %1151 = vmatpush1.msra.mxu0 0.0
    %1152 = vmatprep.subr.mxu0 0.0
    %1153 = vmatpush1.msra.mxu0 0.0
    %1154 = vmatprep.subr.mxu0 0.0
    %1155 = vmatpush1.msra.mxu0 0.0
    %1156 = vmatprep.subr.mxu0 0.0
    %1157 = vmatpush1.msra.mxu0 0.0
    %1158 = vmatprep.subr.mxu0 0.0
    %1159 = vmatpush1.msra.mxu0 0.0
    %1160 = vmatprep.subr.mxu0 0.0
    %1161 = vmatpush1.msra.mxu0 0.0
    %1162 = vmatprep.mubr.f32.mxu0 0.0
    %1163 = vmatmul.mubr.f32.gmra.mrb[0].mxu0 %v1093
    %v1164 = vpop.f32.mrb[0].mxu0
    %v1165 = vadd.f32 0.0, %v1164
    %v1166 = vpop.f32.mrb[0].mxu0
    %1167 = vmatprep.mubr.f32.mxu0 0.0
    %1168 = vmatmul.mubr.f32.gmra.mrb[0].mxu0 %v1096
    %v1169 = vpop.f32.mrb[0].mxu0
    %v1170 = vadd.f32 0.0, %v1169
    %v1171 = vpop.f32.mrb[0].mxu0
    %1172 = vdwg.mxu0
    %v1173 = vadd.f32 %v879, %v1165
    %v1174 = vadd.f32 %v884, %v1170
    %1175 = vrot.lane.b32.xlu0 %v112, 104
    %v1176 = vpop.permute.xlu0 %1175
    %1177 = vrot.lane.b32.xlu0 %v113, 104
    %v1178 = vpop.permute.xlu0 %1177
    %1179 = vrot.lane.b32.xlu0 %v201, 104
    %v1180 = vpop.permute.xlu0 %1179
    %1181 = vrot.lane.b32.xlu0 %v206, 104
    %v1182 = vpop.permute.xlu0 %1181
    %v1183 = vsel %vm321, %v1176, 0
    %v1185 = vsel %vm321, %v1178, 0
    %v1187 = vsel %vm321, %v1180, 0
    %v1189 = vsel %vm321, %v1182, 0
    %1191 = vmatprep.subr.mxu0 0.0
    %1192 = vmatpush1.xpose.msra.mxu0 %v1187
    %1193 = vmatprep.subr.mxu0 0.0
    %1194 = vmatpush1.xpose.msra.mxu0 %v1189
    %1195 = vmatprep.subr.mxu0 0.0
    %1196 = vmatpush1.xpose.msra.mxu0 0.0
    %1197 = vmatprep.subr.mxu0 0.0
    %1198 = vmatpush1.xpose.msra.mxu0 0.0
    %1199 = vmatprep.subr.mxu0 0.0
    %1200 = vmatpush1.xpose.msra.mxu0 0.0
    %1201 = vmatprep.subr.mxu0 0.0
    %1202 = vmatpush1.xpose.msra.mxu0 0.0
    %1203 = vmatprep.subr.mxu0 0.0
    %1204 = vmatpush1.xpose.msra.mxu0 0.0
    %1205 = vmatprep.subr.mxu0 0.0
    %1206 = vmatpush1.xpose.msra.mxu0 0.0
    %1207 = vmatprep.subr.mxu0 0.0
    %1208 = vmatpush1.xpose.msra.mxu0 0.0
    %1209 = vmatprep.subr.mxu0 0.0
    %1210 = vmatpush1.xpose.msra.mxu0 0.0
    %1211 = vmatprep.subr.mxu0 0.0
    %1212 = vmatpush1.xpose.msra.mxu0 0.0
    %1213 = vmatprep.subr.mxu0 0.0
    %1214 = vmatpush1.xpose.msra.mxu0 0.0
    %1215 = vmatprep.subr.mxu0 0.0
    %1216 = vmatpush1.xpose.msra.mxu0 0.0
    %1217 = vmatprep.subr.mxu0 0.0
    %1218 = vmatpush1.xpose.msra.mxu0 0.0
    %1219 = vmatprep.subr.mxu0 0.0
    %1220 = vmatpush1.xpose.msra.mxu0 0.0
    %1221 = vmatprep.subr.mxu0 0.0
    %1222 = vmatpush1.xpose.msra.mxu0 0.0
    %1223 = vmatprep.subr.mxu0 0.0
    %1224 = vmatpush1.xpose.msra.mxu0 0.0
    %1225 = vmatprep.subr.mxu0 0.0
    %1226 = vmatpush1.xpose.msra.mxu0 0.0
    %1227 = vmatprep.subr.mxu0 0.0
    %1228 = vmatpush1.xpose.msra.mxu0 0.0
    %1229 = vmatprep.subr.mxu0 0.0
    %1230 = vmatpush1.xpose.msra.mxu0 0.0
    %1231 = vmatprep.subr.mxu0 0.0
    %1232 = vmatpush1.xpose.msra.mxu0 0.0
    %1233 = vmatprep.subr.mxu0 0.0
    %1234 = vmatpush1.xpose.msra.mxu0 0.0
    %1235 = vmatprep.subr.mxu0 0.0
    %1236 = vmatpush1.xpose.msra.mxu0 0.0
    %1237 = vmatprep.subr.mxu0 0.0
    %1238 = vmatpush1.xpose.msra.mxu0 0.0
    %1239 = vmatprep.subr.mxu0 0.0
    %1240 = vmatpush1.xpose.msra.mxu0 0.0
    %1241 = vmatprep.subr.mxu0 0.0
    %1242 = vmatpush1.xpose.msra.mxu0 0.0
    %1243 = vmatprep.subr.mxu0 0.0
    %1244 = vmatpush1.xpose.msra.mxu0 0.0
    %1245 = vmatprep.subr.mxu0 0.0
    %1246 = vmatpush1.xpose.msra.mxu0 0.0
    %1247 = vmatprep.subr.mxu0 0.0
    %1248 = vmatpush1.xpose.msra.mxu0 0.0
    %1249 = vmatprep.subr.mxu0 0.0
    %1250 = vmatpush1.xpose.msra.mxu0 0.0
    %1251 = vmatprep.subr.mxu0 0.0
    %1252 = vmatpush1.xpose.msra.mxu0 0.0
    %1253 = vmatprep.subr.mxu0 0.0
    %1254 = vmatpush1.xpose.msra.mxu0 0.0
    %1255 = vmatprep.mubr.f32.mxu0 0.0
    %1256 = vmatmul.mubr.f32.gmra.mrb[0].mxu0 %v1183
    %v1257 = vpop.f32.mrb[0].mxu0
    %v1258 = vadd.f32 %v319, %v1257
    %v1259 = vpop.f32.mrb[0].mxu0
    %1260 = vmatprep.mubr.f32.mxu0 0.0
    %1261 = vmatmul.mubr.f32.gmra.mrb[0].mxu0 %v1185
    %v1262 = vpop.f32.mrb[0].mxu0
    %v1263 = vadd.f32 %v320, %v1262
    %v1264 = vpop.f32.mrb[0].mxu0
    %1265 = vdwg.mxu0
    %v1266 = vsel %vm409, %v1258, -inf
    %1267 = vmax.xlane.f32.xlu0 %v1266
    %v1268 = vpop.xlane.xlu0 %1267
    %v1269 = vsel %vm409, %v1263, -inf
    %1270 = vmax.xlane.f32.xlu0 %v1269
    %v1271 = vpop.xlane.xlu0 %1270
    %v1272 = vsub.f32 %v1258, %v1268
    %v1273 = vsub.f32 %v1263, %v1271
    %v1274 = vmul.f32 %v1272, 1.442695
    %v1275 = vpow.pop %v1274
    %v1276 = vmul.f32 %v1273, 1.442695
    %v1277 = vpow.pop %v1276
    %v1278 = vsel %vm409, %v1275, 0.0
    %1279 = vadd.xlane.f32.xlu0 %v1278
    %v1280 = vpop.xlane.xlu0 %1279
    %v1281 = vsel %vm409, %v1277, 0.0
    %1282 = vadd.xlane.f32.xlu0 %v1281
    %v1283 = vpop.xlane.xlu0 %1282
    %v1284 = vrcp.pop %v1280
    %v1285 = vmul.f32 %v1275, %v1284
    %v1286 = vrcp.pop %v1283
    %v1287 = vmul.f32 %v1277, %v1286
    %1288 = vrot.lane.b32.xlu0 %v292, 104
    %v1289 = vpop.permute.xlu0 %1288
    %1290 = vrot.lane.b32.xlu0 %v297, 104
    %v1291 = vpop.permute.xlu0 %1290
    %v1295 = vsel %vm409, %v1285, 0
    %v1298 = vsel %vm409, %v1287, 0
    %1300 = vmatprep.subr.mxu0 0.0
    %1301 = vmatpush1.msra.mxu0 %v1289
    %1302 = vmatprep.subr.mxu0 0.0
    %1303 = vmatpush1.msra.mxu0 %v1291
    %1304 = vmatprep.subr.mxu0 0.0
    %1305 = vmatpush1.msra.mxu0 0.0
    %1306 = vmatprep.subr.mxu0 0.0
    %1307 = vmatpush1.msra.mxu0 0.0
    %1308 = vmatprep.subr.mxu0 0.0
    %1309 = vmatpush1.msra.mxu0 0.0
    %1310 = vmatprep.subr.mxu0 0.0
    %1311 = vmatpush1.msra.mxu0 0.0
    %1312 = vmatprep.subr.mxu0 0.0
    %1313 = vmatpush1.msra.mxu0 0.0
    %1314 = vmatprep.subr.mxu0 0.0
    %1315 = vmatpush1.msra.mxu0 0.0
    %1316 = vmatprep.subr.mxu0 0.0
    %1317 = vmatpush1.msra.mxu0 0.0
    %1318 = vmatprep.subr.mxu0 0.0
    %1319 = vmatpush1.msra.mxu0 0.0
    %1320 = vmatprep.subr.mxu0 0.0
    %1321 = vmatpush1.msra.mxu0 0.0
    %1322 = vmatprep.subr.mxu0 0.0
    %1323 = vmatpush1.msra.mxu0 0.0
    %1324 = vmatprep.subr.mxu0 0.0
    %1325 = vmatpush1.msra.mxu0 0.0
    %1326 = vmatprep.subr.mxu0 0.0
    %1327 = vmatpush1.msra.mxu0 0.0
    %1328 = vmatprep.subr.mxu0 0.0
    %1329 = vmatpush1.msra.mxu0 0.0
    %1330 = vmatprep.subr.mxu0 0.0
    %1331 = vmatpush1.msra.mxu0 0.0
    %1332 = vmatprep.subr.mxu0 0.0
    %1333 = vmatpush1.msra.mxu0 0.0
    %1334 = vmatprep.subr.mxu0 0.0
    %1335 = vmatpush1.msra.mxu0 0.0
    %1336 = vmatprep.subr.mxu0 0.0
    %1337 = vmatpush1.msra.mxu0 0.0
    %1338 = vmatprep.subr.mxu0 0.0
    %1339 = vmatpush1.msra.mxu0 0.0
    %1340 = vmatprep.subr.mxu0 0.0
    %1341 = vmatpush1.msra.mxu0 0.0
    %1342 = vmatprep.subr.mxu0 0.0
    %1343 = vmatpush1.msra.mxu0 0.0
    %1344 = vmatprep.subr.mxu0 0.0
    %1345 = vmatpush1.msra.mxu0 0.0
    %1346 = vmatprep.subr.mxu0 0.0
    %1347 = vmatpush1.msra.mxu0 0.0
    %1348 = vmatprep.subr.mxu0 0.0
    %1349 = vmatpush1.msra.mxu0 0.0
    %1350 = vmatprep.subr.mxu0 0.0
    %1351 = vmatpush1.msra.mxu0 0.0
    %1352 = vmatprep.subr.mxu0 0.0
    %1353 = vmatpush1.msra.mxu0 0.0
    %1354 = vmatprep.subr.mxu0 0.0
    %1355 = vmatpush1.msra.mxu0 0.0
    %1356 = vmatprep.subr.mxu0 0.0
    %1357 = vmatpush1.msra.mxu0 0.0
    %1358 = vmatprep.subr.mxu0 0.0
    %1359 = vmatpush1.msra.mxu0 0.0
    %1360 = vmatprep.subr.mxu0 0.0
    %1361 = vmatpush1.msra.mxu0 0.0
    %1362 = vmatprep.subr.mxu0 0.0
    %1363 = vmatpush1.msra.mxu0 0.0
    %1364 = vmatprep.mubr.f32.mxu0 0.0
    %1365 = vmatmul.mubr.f32.gmra.mrb[0].mxu0 %v1295
    %v1366 = vpop.f32.mrb[0].mxu0
    %v1367 = vadd.f32 0.0, %v1366
    %v1368 = vpop.f32.mrb[0].mxu0
    %1369 = vmatprep.mubr.f32.mxu0 0.0
    %1370 = vmatmul.mubr.f32.gmra.mrb[0].mxu0 %v1298
    %v1371 = vpop.f32.mrb[0].mxu0
    %v1372 = vadd.f32 0.0, %v1371
    %v1373 = vpop.f32.mrb[0].mxu0
    %1374 = vdwg.mxu0
    %1375 = vrot.lane.b32.xlu0 %v25, 32
    %v1376 = vpop.permute.xlu0 %1375
    %v1379 = vsel %vm321, %v1367, 0
    %v1382 = vsel %vm321, %v1372, 0
    %1384 = vmatprep.subr.mxu0 0.0
    %1385 = vmatpush1.msra.mxu0 %v1376
    %1386 = vmatprep.subr.mxu0 0.0
    %1387 = vmatpush1.msra.mxu0 0.0
    %1388 = vmatprep.subr.mxu0 0.0
    %1389 = vmatpush1.msra.mxu0 0.0
    %1390 = vmatprep.subr.mxu0 0.0
    %1391 = vmatpush1.msra.mxu0 0.0
    %1392 = vmatprep.subr.mxu0 0.0
    %1393 = vmatpush1.msra.mxu0 0.0
    %1394 = vmatprep.subr.mxu0 0.0
    %1395 = vmatpush1.msra.mxu0 0.0
    %1396 = vmatprep.subr.mxu0 0.0
    %1397 = vmatpush1.msra.mxu0 0.0
    %1398 = vmatprep.subr.mxu0 0.0
    %1399 = vmatpush1.msra.mxu0 0.0
    %1400 = vmatprep.subr.mxu0 0.0
    %1401 = vmatpush1.msra.mxu0 0.0
    %1402 = vmatprep.subr.mxu0 0.0
    %1403 = vmatpush1.msra.mxu0 0.0
    %1404 = vmatprep.subr.mxu0 0.0
    %1405 = vmatpush1.msra.mxu0 0.0
    %1406 = vmatprep.subr.mxu0 0.0
    %1407 = vmatpush1.msra.mxu0 0.0
    %1408 = vmatprep.subr.mxu0 0.0
    %1409 = vmatpush1.msra.mxu0 0.0
    %1410 = vmatprep.subr.mxu0 0.0
    %1411 = vmatpush1.msra.mxu0 0.0
    %1412 = vmatprep.subr.mxu0 0.0
    %1413 = vmatpush1.msra.mxu0 0.0
    %1414 = vmatprep.subr.mxu0 0.0
    %1415 = vmatpush1.msra.mxu0 0.0
    %1416 = vmatprep.subr.mxu0 0.0
    %1417 = vmatpush1.msra.mxu0 0.0
    %1418 = vmatprep.subr.mxu0 0.0
    %1419 = vmatpush1.msra.mxu0 0.0
    %1420 = vmatprep.subr.mxu0 0.0
    %1421 = vmatpush1.msra.mxu0 0.0
    %1422 = vmatprep.subr.mxu0 0.0
    %1423 = vmatpush1.msra.mxu0 0.0
    %1424 = vmatprep.subr.mxu0 0.0
    %1425 = vmatpush1.msra.mxu0 0.0
    %1426 = vmatprep.subr.mxu0 0.0
    %1427 = vmatpush1.msra.mxu0 0.0
    %1428 = vmatprep.subr.mxu0 0.0
    %1429 = vmatpush1.msra.mxu0 0.0
    %1430 = vmatprep.subr.mxu0 0.0
    %1431 = vmatpush1.msra.mxu0 0.0
    %1432 = vmatprep.subr.mxu0 0.0
    %1433 = vmatpush1.msra.mxu0 0.0
    %1434 = vmatprep.subr.mxu0 0.0
    %1435 = vmatpush1.msra.mxu0 0.0
    %1436 = vmatprep.subr.mxu0 0.0
    %1437 = vmatpush1.msra.mxu0 0.0
    %1438 = vmatprep.subr.mxu0 0.0
    %1439 = vmatpush1.msra.mxu0 0.0
    %1440 = vmatprep.subr.mxu0 0.0
    %1441 = vmatpush1.msra.mxu0 0.0
    %1442 = vmatprep.subr.mxu0 0.0
    %1443 = vmatpush1.msra.mxu0 0.0
    %1444 = vmatprep.subr.mxu0 0.0
    %1445 = vmatpush1.msra.mxu0 0.0
    %1446 = vmatprep.subr.mxu0 0.0
    %1447 = vmatpush1.msra.mxu0 0.0
    %1448 = vmatprep.mubr.f32.mxu0 0.0
    %1449 = vmatmul.mubr.f32.gmra.mrb[0].mxu0 %v1379
    %v1450 = vpop.f32.mrb[0].mxu0
    %v1451 = vadd.f32 0.0, %v1450
    %v1452 = vpop.f32.mrb[0].mxu0
    %1453 = vmatprep.mubr.f32.mxu0 0.0
    %1454 = vmatmul.mubr.f32.gmra.mrb[0].mxu0 %v1382
    %v1455 = vpop.f32.mrb[0].mxu0
    %v1456 = vadd.f32 0.0, %v1455
    %v1457 = vpop.f32.mrb[0].mxu0
    %1458 = vdwg.mxu0
    %v1459 = vadd.f32 %v1173, %v1451
    %v1460 = vadd.f32 %v1174, %v1456
    %v1461 = vlaneseq
    %v1462 = vshrl.u32 %v1461, 7
    %v1463 = vsub.s32 3, %v1462
    %v1464 = vrot.slane %v20, %v1463
    %v1465 = vadd.f32 %v1459, %v1464
    %v1466 = vadd.f32 %v1460, %v1464
    %v1467 = vadd.f32 %v1465, %v18
    %v1468 = vadd.f32 %v1466, %v19
    %v1469 = vsel %vm30, %v1467, 0.0
    %1470 = vadd.xlane.f32.xlu0 %v1469
    %v1471 = vpop.xlane.xlu0 %1470
    %v1472 = vsel %vm30, %v1468, 0.0
    %1473 = vadd.xlane.f32.xlu0 %v1472
    %v1474 = vpop.xlane.xlu0 %1473
    %v1475 = vrcp.pop 32.0
    %v1476 = vmul.f32 %v1471, %v1475
    %v1477 = vmul.f32 %v1474, %v1475
    %v1478 = vsub.f32 %v1467, %v1476
    %v1479 = vsub.f32 %v1468, %v1477
    %v1480 = vmul.f32 %v1478, %v1478
    %v1481 = vmul.f32 %v1479, %v1479
    %v1482 = vsel %vm30, %v1480, 0.0
    %1483 = vadd.xlane.f32.xlu0 %v1482
    %v1484 = vpop.xlane.xlu0 %1483
    %v1485 = vsel %vm30, %v1481, 0.0
    %1486 = vadd.xlane.f32.xlu0 %v1485
    %v1487 = vpop.xlane.xlu0 %1486
    %v1488 = vmul.f32 %v1484, %v1475
    %v1489 = vmul.f32 %v1487, %v1475
    %v1490 = vadd.f32 %v1488, 1e-05
    %v1491 = vadd.f32 %v1489, 1e-05
    %v1492 = vrsqrt.pop %v1490
    %v1493 = vrsqrt.pop %v1491
    %v1494 = vmul.f32 %v1478, %v1492
    %v1495 = vmul.f32 %v1479, %v1493
    %v1496 = vlaneseq
    %v1497 = vshrl.u32 %v1496, 7
    %v1498 = vsub.s32 4, %v1497
    %v1499 = vrot.slane %v20, %v1498
    %v1500 = vmul.f32 %v1494, %v1499
    %v1501 = vmul.f32 %v1495, %v1499
    %v1502 = vlaneseq
    %v1503 = vshrl.u32 %v1502, 7
    %v1504 = vsub.s32 5, %v1503
    %v1505 = vrot.slane %v20, %v1504
    %v1506 = vadd.f32 %v1500, %v1505
    %v1507 = vadd.f32 %v1501, %v1505
    %v1508 = vld [vmem:[%s1 + $0x8] sm:$0xff]
    %v1509 = vld [vmem:[%s1 + $0x18] sm:$0xff]
    %v1510 = vld [vmem:[%s1 + $0x28] sm:$0xff]
    %v1511 = vld [vmem:[%s1 + $0x38] sm:$0xff]
    %v1512 = vlaneseq
    %v1513 = vshrl.u32 %v1512, 7
    %v1514 = vsub.s32 6, %v1513
    %v1515 = vrot.slane %v20, %v1514
    %v1517 = vsel %vm30, %v1506, 0
    %v1520 = vsel %vm30, %v1507, 0
    %1522 = vmatprep.subr.mxu0 0.0
    %1523 = vmatpush1.msra.mxu0 %v1508
    %1524 = vmatprep.subr.mxu0 0.0
    %1525 = vmatpush1.msra.mxu0 %v1509
    %1526 = vmatprep.subr.mxu0 0.0
    %1527 = vmatpush1.msra.mxu0 %v1510
    %1528 = vmatprep.subr.mxu0 0.0
    %1529 = vmatpush1.msra.mxu0 %v1511
    %1530 = vmatprep.subr.mxu0 0.0
    %1531 = vmatpush1.msra.mxu0 0.0
    %1532 = vmatprep.subr.mxu0 0.0
    %1533 = vmatpush1.msra.mxu0 0.0
    %1534 = vmatprep.subr.mxu0 0.0
    %1535 = vmatpush1.msra.mxu0 0.0
    %1536 = vmatprep.subr.mxu0 0.0
    %1537 = vmatpush1.msra.mxu0 0.0
    %1538 = vmatprep.subr.mxu0 0.0
    %1539 = vmatpush1.msra.mxu0 0.0
    %1540 = vmatprep.subr.mxu0 0.0
    %1541 = vmatpush1.msra.mxu0 0.0
    %1542 = vmatprep.subr.mxu0 0.0
    %1543 = vmatpush1.msra.mxu0 0.0
    %1544 = vmatprep.subr.mxu0 0.0
    %1545 = vmatpush1.msra.mxu0 0.0
    %1546 = vmatprep.subr.mxu0 0.0
    %1547 = vmatpush1.msra.mxu0 0.0
    %1548 = vmatprep.subr.mxu0 0.0
    %1549 = vmatpush1.msra.mxu0 0.0
    %1550 = vmatprep.subr.mxu0 0.0
    %1551 = vmatpush1.msra.mxu0 0.0
    %1552 = vmatprep.subr.mxu0 0.0
    %1553 = vmatpush1.msra.mxu0 0.0
    %1554 = vmatprep.subr.mxu0 0.0
    %1555 = vmatpush1.msra.mxu0 0.0
    %1556 = vmatprep.subr.mxu0 0.0
    %1557 = vmatpush1.msra.mxu0 0.0
    %1558 = vmatprep.subr.mxu0 0.0
    %1559 = vmatpush1.msra.mxu0 0.0
    %1560 = vmatprep.subr.mxu0 0.0
    %1561 = vmatpush1.msra.mxu0 0.0
    %1562 = vmatprep.subr.mxu0 0.0
    %1563 = vmatpush1.msra.mxu0 0.0
    %1564 = vmatprep.subr.mxu0 0.0
    %1565 = vmatpush1.msra.mxu0 0.0
    %1566 = vmatprep.subr.mxu0 0.0
    %1567 = vmatpush1.msra.mxu0 0.0
    %1568 = vmatprep.subr.mxu0 0.0
    %1569 = vmatpush1.msra.mxu0 0.0
    %1570 = vmatprep.subr.mxu0 0.0
    %1571 = vmatpush1.msra.mxu0 0.0
    %1572 = vmatprep.subr.mxu0 0.0
    %1573 = vmatpush1.msra.mxu0 0.0
    %1574 = vmatprep.subr.mxu0 0.0
    %1575 = vmatpush1.msra.mxu0 0.0
    %1576 = vmatprep.subr.mxu0 0.0
    %1577 = vmatpush1.msra.mxu0 0.0
    %1578 = vmatprep.subr.mxu0 0.0
    %1579 = vmatpush1.msra.mxu0 0.0
    %1580 = vmatprep.subr.mxu0 0.0
    %1581 = vmatpush1.msra.mxu0 0.0
    %1582 = vmatprep.subr.mxu0 0.0
    %1583 = vmatpush1.msra.mxu0 0.0
    %1584 = vmatprep.subr.mxu0 0.0
    %1585 = vmatpush1.msra.mxu0 0.0
    %1586 = vmatprep.mubr.f32.mxu0 0.0
    %1587 = vmatmul.mubr.f32.gmra.mrb[0].mxu0 %v1517
    %v1588 = vpop.f32.mrb[0].mxu0
    %v1589 = vadd.f32 %v1515, %v1588
    %v1590 = vpop.f32.mrb[0].mxu0
    %1591 = vmatprep.mubr.f32.mxu0 0.0
    %1592 = vmatmul.mubr.f32.gmra.mrb[0].mxu0 %v1520
    %v1593 = vpop.f32.mrb[0].mxu0
    %v1594 = vadd.f32 %v1515, %v1593
    %v1595 = vpop.f32.mrb[0].mxu0
    %1596 = vdwg.mxu0
    %v1597 = vmax.f32 %v1589, 0.0
    %v1598 = vmax.f32 %v1594, 0.0
    %v1599 = vld [vmem:[%s2] sm:$0xff]
    %v1600 = vld [vmem:[%s2 + $0x8] sm:$0xff]
    %v1601 = vld [vmem:[%s2 + $0x10] sm:$0xff]
    %v1602 = vld [vmem:[%s2 + $0x18] sm:$0xff]
    %v1603 = vld [vmem:[%s2 + $0x20] sm:$0xff]
    %v1604 = vld [vmem:[%s2 + $0x28] sm:$0xff]
    %v1605 = vld [vmem:[%s2 + $0x30] sm:$0xff]
    %v1606 = vld [vmem:[%s2 + $0x38] sm:$0xff]
    %v1607 = vld [vmem:[%s2 + $0x40] sm:$0xff]
    %v1608 = vld [vmem:[%s2 + $0x48] sm:$0xff]
    %v1609 = vld [vmem:[%s2 + $0x50] sm:$0xff]
    %v1610 = vld [vmem:[%s2 + $0x58] sm:$0xff]
    %v1611 = vld [vmem:[%s2 + $0x60] sm:$0xff]
    %v1612 = vld [vmem:[%s2 + $0x68] sm:$0xff]
    %v1613 = vld [vmem:[%s2 + $0x70] sm:$0xff]
    %v1614 = vld [vmem:[%s2 + $0x78] sm:$0xff]
    %v1615 = vlaneseq
    %v1616 = vshrl.u32 %v1615, 7
    %v1617 = vsub.s32 7, %v1616
    %v1618 = vrot.slane %v20, %v1617
    %1619 = vmatprep.subr.mxu0 0.0
    %1620 = vmatpush1.msra.mxu0 %v1599
    %1621 = vmatprep.subr.mxu0 0.0
    %1622 = vmatpush1.msra.mxu0 %v1600
    %1623 = vmatprep.subr.mxu0 0.0
    %1624 = vmatpush1.msra.mxu0 %v1601
    %1625 = vmatprep.subr.mxu0 0.0
    %1626 = vmatpush1.msra.mxu0 %v1602
    %1627 = vmatprep.subr.mxu0 0.0
    %1628 = vmatpush1.msra.mxu0 %v1603
    %1629 = vmatprep.subr.mxu0 0.0
    %1630 = vmatpush1.msra.mxu0 %v1604
    %1631 = vmatprep.subr.mxu0 0.0
    %1632 = vmatpush1.msra.mxu0 %v1605
    %1633 = vmatprep.subr.mxu0 0.0
    %1634 = vmatpush1.msra.mxu0 %v1606
    %1635 = vmatprep.subr.mxu0 0.0
    %1636 = vmatpush1.msra.mxu0 %v1607
    %1637 = vmatprep.subr.mxu0 0.0
    %1638 = vmatpush1.msra.mxu0 %v1608
    %1639 = vmatprep.subr.mxu0 0.0
    %1640 = vmatpush1.msra.mxu0 %v1609
    %1641 = vmatprep.subr.mxu0 0.0
    %1642 = vmatpush1.msra.mxu0 %v1610
    %1643 = vmatprep.subr.mxu0 0.0
    %1644 = vmatpush1.msra.mxu0 %v1611
    %1645 = vmatprep.subr.mxu0 0.0
    %1646 = vmatpush1.msra.mxu0 %v1612
    %1647 = vmatprep.subr.mxu0 0.0
    %1648 = vmatpush1.msra.mxu0 %v1613
    %1649 = vmatprep.subr.mxu0 0.0
    %1650 = vmatpush1.msra.mxu0 %v1614
    %1651 = vmatprep.subr.mxu0 0.0
    %1652 = vmatpush1.msra.mxu0 0.0
    %1653 = vmatprep.subr.mxu0 0.0
    %1654 = vmatpush1.msra.mxu0 0.0
    %1655 = vmatprep.subr.mxu0 0.0
    %1656 = vmatpush1.msra.mxu0 0.0
    %1657 = vmatprep.subr.mxu0 0.0
    %1658 = vmatpush1.msra.mxu0 0.0
    %1659 = vmatprep.subr.mxu0 0.0
    %1660 = vmatpush1.msra.mxu0 0.0
    %1661 = vmatprep.subr.mxu0 0.0
    %1662 = vmatpush1.msra.mxu0 0.0
    %1663 = vmatprep.subr.mxu0 0.0
    %1664 = vmatpush1.msra.mxu0 0.0
    %1665 = vmatprep.subr.mxu0 0.0
    %1666 = vmatpush1.msra.mxu0 0.0
    %1667 = vmatprep.subr.mxu0 0.0
    %1668 = vmatpush1.msra.mxu0 0.0
    %1669 = vmatprep.subr.mxu0 0.0
    %1670 = vmatpush1.msra.mxu0 0.0
    %1671 = vmatprep.subr.mxu0 0.0
    %1672 = vmatpush1.msra.mxu0 0.0
    %1673 = vmatprep.subr.mxu0 0.0
    %1674 = vmatpush1.msra.mxu0 0.0
    %1675 = vmatprep.subr.mxu0 0.0
    %1676 = vmatpush1.msra.mxu0 0.0
    %1677 = vmatprep.subr.mxu0 0.0
    %1678 = vmatpush1.msra.mxu0 0.0
    %1679 = vmatprep.subr.mxu0 0.0
    %1680 = vmatpush1.msra.mxu0 0.0
    %1681 = vmatprep.subr.mxu0 0.0
    %1682 = vmatpush1.msra.mxu0 0.0
    %1683 = vmatprep.mubr.f32.mxu0 0.0
    %1684 = vmatmul.mubr.f32.gmra.mrb[0].mxu0 %v1597
    %v1685 = vpop.f32.mrb[0].mxu0
    %v1686 = vadd.f32 %v1618, %v1685
    %v1687 = vpop.f32.mrb[0].mxu0
    %1688 = vmatprep.mubr.f32.mxu0 0.0
    %1689 = vmatmul.mubr.f32.gmra.mrb[0].mxu0 %v1598
    %v1690 = vpop.f32.mrb[0].mxu0
    %v1691 = vadd.f32 %v1618, %v1690
    %v1692 = vpop.f32.mrb[0].mxu0
    %1693 = vdwg.mxu0
    %v1694 = vadd.f32 %v1506, %v1686
    %v1695 = vadd.f32 %v1507, %v1691
    %v1696 = vsel %vm30, %v1694, 0.0
    %1697 = vadd.xlane.f32.xlu0 %v1696
    %v1698 = vpop.xlane.xlu0 %1697
    %v1699 = vsel %vm30, %v1695, 0.0
    %1700 = vadd.xlane.f32.xlu0 %v1699
    %v1701 = vpop.xlane.xlu0 %1700
    %v1702 = vmul.f32 %v1698, %v1475
    %v1703 = vmul.f32 %v1701, %v1475
    %v1704 = vsub.f32 %v1694, %v1702
    %v1705 = vsub.f32 %v1695, %v1703
    %v1706 = vmul.f32 %v1704, %v1704
    %v1707 = vmul.f32 %v1705, %v1705
    %v1708 = vsel %vm30, %v1706, 0.0
    %1709 = vadd.xlane.f32.xlu0 %v1708
    %v1710 = vpop.xlane.xlu0 %1709
    %v1711 = vsel %vm30, %v1707, 0.0
    %1712 = vadd.xlane.f32.xlu0 %v1711
    %v1713 = vpop.xlane.xlu0 %1712
    %v1714 = vmul.f32 %v1710, %v1475
    %v1715 = vmul.f32 %v1713, %v1475
    %v1716 = vadd.f32 %v1714, 1e-05
    %v1717 = vadd.f32 %v1715, 1e-05
    %v1718 = vrsqrt.pop %v1716
    %v1719 = vrsqrt.pop %v1717
    %v1720 = vmul.f32 %v1704, %v1718
    %v1721 = vmul.f32 %v1705, %v1719
    %v1722 = vlaneseq
    %v1723 = vshrl.u32 %v1722, 7
    %v1724 = vsub.s32 0, %v1723
    %v1725 = vrot.slane %v21, %v1724
    %v1726 = vmul.f32 %v1720, %v1725
    %v1727 = vmul.f32 %v1721, %v1725
    %v1728 = vlaneseq
    %v1729 = vshrl.u32 %v1728, 7
    %v1730 = vsub.s32 1, %v1729
    %v1731 = vrot.slane %v21, %v1730
    %v1732 = vadd.f32 %v1726, %v1731
    %v1733 = vadd.f32 %v1727, %v1731
    %1734 = vst.msk [vmem:[#allocation2] sm:$0xff] %vm30, %v1732
    %1735 = vst.msk [vmem:[#allocation2 + $0x8] sm:$0xff] %vm30, %v1733
    // Predicated region
    $region18: #{tpu_custom_call.1} parent=1 // pred_check
      _
    $region19: #{tpu_custom_call.1} parent=1 // pred_check_branch
      %1737 = sbr.rel (0) target = $region21
    $region20: #{tpu_custom_call.1} parent=1 // pred_region
      %s1739 = ssub.s32 256, 256
      %1740 = vsyncadd [#allocation3], %s1739
      %s1741 = sshll.u32 [#allocation2], 4
      %s1742 = int_to_ptr.vmem [resolvable:$true] %s1741
      %1747 = dma.vmem_to_hbm [thread:$0]  %s1742, 256, %s4, [#allocation3], 128, 128, 8
    $region21: #{tpu_custom_call.1} parent=1 // pred_fallthru
      _
    // Predicated region
    $region22: #{tpu_custom_call.1} parent=1 // pred_check
      _
    $region23: #{tpu_custom_call.1} parent=1 // pred_check_branch
      %1749 = sbr.rel (0) target = $region25
    $region24: #{tpu_custom_call.1} parent=1 // pred_region
      %1750 = dma.done [#allocation3], 256
    $region25: #{tpu_custom_call.1} parent=1 // pred_fallthru
      _
    %1751 = vsyncpa [#allocation3], 1

</llo_original>
